<compile_context>
chip_gen: v7x
topology: tpu7x:2x2x1
jax: 0.10.0
libtpu: 0.0.40
codegen_flags: <defaults>
</compile_context>

<pallas_src>
import jax
import jax.numpy as jnp
import numpy as np
from jax import lax
from jax.experimental import pallas as pl
from jax.experimental.pallas import tpu as pltpu


def _round_up(x, m):
    return (x + m - 1) // m * m


def _lane_tile(p_pad):
    """Largest of 512/256/128 that divides the (already 128-padded) lane dim."""
    for t in (512, 256, 128):
        if p_pad % t == 0:
            return t
    return p_pad


# ---------------------------------------------------------------------------
# Pallas kernels
# ---------------------------------------------------------------------------
def _conv_gemm_kernel(p_ref, w_ref, b_ref, o_ref):
    # p: (1, CKK, TP) bf16 ; w: (TCO, CKK) bf16 ; b: (TCO, 1) f32
    # o: (1, TCO, TP)      ; o = w @ p + b   (lane dim = spatial positions)
    acc = jnp.dot(w_ref[...], p_ref[0], preferred_element_type=jnp.float32)
    o_ref[0] = (acc + b_ref[...]).astype(o_ref.dtype)


def conv_gemm_t(patches, w, bias, out_dtype=jnp.bfloat16):
    """Channel-major conv GEMM: out[b] = w @ patches[b] + bias.

    patches: (B, CKK, P_pad) bf16   (lane dim = output spatial positions)
    w:       (Cout, CKK)     bf16
    bias:    (Cout, 1)       f32
    returns: (B, Cout, P_pad) out_dtype  — i.e. NCHW with H*W flattened+padded.
    """
    B, CKK, P_pad = patches.shape
    Cout = w.shape[0]
    tco = 256 if Cout % 256 == 0 else Cout
    tp = _lane_tile(P_pad)
    grid = (B, Cout // tco, P_pad // tp)
    return pl.pallas_call(
        _conv_gemm_kernel,
        out_shape=jax.ShapeDtypeStruct((B, Cout, P_pad), out_dtype),
        grid=grid,
        in_specs=[
            pl.BlockSpec((1, CKK, tp), lambda bi, ci, pi: (bi, 0, pi)),
            pl.BlockSpec((tco, CKK), lambda bi, ci, pi: (ci, 0)),
            pl.BlockSpec((tco, 1), lambda bi, ci, pi: (ci, 0)),
        ],
        out_specs=pl.BlockSpec((1, tco, tp), lambda bi, ci, pi: (bi, ci, pi)),
        compiler_params=pltpu.CompilerParams(
            dimension_semantics=("parallel", "parallel", "parallel")),
    )(patches, w, bias)


def _xcorr_kernel(p_ref, k_ref, b_ref, o_ref):
    # p: (1, CKK, TP) bf16 ; k: (1, O, CKK) bf16 ; b: (O, 1) f32
    # o: (1, O, TP) f32    ; lane dim = spatial positions -> lane-dense stores.
    o_ref[0] = (jnp.dot(k_ref[0], p_ref[0],
                        preferred_element_type=jnp.float32) + b_ref[...])


def xcorr_t(patches_all, kmat, bias, branch):
    """Lane-dense xcorr_fast: out[b] = kmat[b] @ patches_all[b, branch block] + bias.

    patches_all: (B, n_branch*CKK, P_pad) bf16 — joint im2col of the fused
                 search features; `branch` selects a contiguous CKK row block
                 purely via the BlockSpec index_map (no HBM slice materialized).
    kmat:        (B, O, CKK) bf16 ; bias: (O, 1) f32
    returns:     (B, O, P_pad) f32
    """
    B, O, CKK = kmat.shape
    P_pad = patches_all.shape[2]
    assert patches_all.shape[1] % CKK == 0 and CKK % 8 == 0
    tp = _lane_tile(P_pad)
    grid = (B, P_pad // tp)
    return pl.pallas_call(
        _xcorr_kernel,
        out_shape=jax.ShapeDtypeStruct((B, O, P_pad), jnp.float32),
        grid=grid,
        in_specs=[
            pl.BlockSpec((1, CKK, tp), lambda bi, ti: (bi, branch, ti)),
            pl.BlockSpec((1, O, CKK), lambda bi, ti: (bi, 0, 0)),
            pl.BlockSpec((O, 1), lambda bi, ti: (0, 0)),
        ],
        out_specs=pl.BlockSpec((1, O, tp), lambda bi, ti: (bi, 0, ti)),
        compiler_params=pltpu.CompilerParams(
            dimension_semantics=("parallel", "parallel")),
    )(patches_all, kmat, bias)


# ---------------------------------------------------------------------------
# XLA-side layout plumbing (im2col, weight fusion) — all channel-major
# ---------------------------------------------------------------------------
def _im2col_cm(x, kh, kw, p_pad):
    """(B, C, H, W) -> (B, C*kh*kw, p_pad); row order (c, u, v), lanes = OH*OW."""
    B, C, H, W = x.shape
    oh, ow = H - kh + 1, W - kw + 1
    cols = [x[:, :, u:u + oh, v:v + ow] for u in range(kh) for v in range(kw)]
    p = jnp.stack(cols, axis=2).reshape(B, C * kh * kw, oh * ow)
    if p_pad > oh * ow:
        p = jnp.pad(p, ((0, 0), (0, 0), (0, p_pad - oh * ow)))
    return p


def upchannel_ban_forward(params, z_f, x_f, cls_out=2, loc_out=4):
    B, C, Hz, Wz = z_f.shape
    kc = params["tcls_w"].shape[2]                # 3x3 template/search convs
    hk, wk = Hz - kc + 1, Wz - kc + 1             # template-kernel spatial
    Hx, Wx = x_f.shape[2], x_f.shape[3]
    hf, wf = Hx - kc + 1, Wx - kc + 1             # search-feature spatial
    oh, ow = hf - hk + 1, wf - wk + 1             # xcorr output spatial
    ckk1 = C * kc * kc
    kk = hk * wk
    ckk2 = C * kk
    f32, bf16 = jnp.float32, jnp.bfloat16

    # fused conv weights: template = [cls ; loc] along Cout, search likewise
    w_t = jnp.concatenate([params["tcls_w"], params["tloc_w"]], 0).reshape(-1, ckk1)
    b_t = jnp.concatenate([params["tcls_b"], params["tloc_b"]])[:, None]
    w_s = jnp.concatenate([params["scls_w"], params["sloc_w"]], 0).reshape(-1, ckk1)
    b_s = jnp.concatenate([params["scls_b"], params["sloc_b"]])[:, None]

    # im2col of the raw features (bf16, channel-major, lane-padded).
    # TODO(synk): pull patch extraction into the Pallas kernels (sum of shifted
    # window matmuls over the raw feature) to avoid materializing the
    # kh*kw-inflated patch tensors in HBM — the remaining roofline gap.
    zp = _im2col_cm(z_f.astype(bf16), kc, kc, _round_up(kk, 128))
    xp = _im2col_cm(x_f.astype(bf16), kc, kc, _round_up(hf * wf, 128))

    # two fused conv GEMMs replace the four Conv2d's (outputs already NC(HW))
    tk = conv_gemm_t(zp, w_t.astype(bf16), b_t.astype(f32))     # (B, C*(c+l), kk_pad)
    feat = conv_gemm_t(xp, w_s.astype(bf16), b_s.astype(f32))   # (B, 2C, hf*wf_pad)

    # flatten template kernels; fold the 1x1 loc_adjust into the loc kernel
    kt = tk[:, :, :kk]
    k_cls = kt[:, :C * cls_out].reshape(B, cls_out, ckk2)
    k_loc = kt[:, C * cls_out:].reshape(B, loc_out, ckk2).astype(f32)
    adj_w = params["adj_w"].reshape(loc_out, loc_out).astype(f32)
    k_loc = jnp.einsum("po,boc->bpc", adj_w, k_loc)              # (p@k)@W == p@(k@W)
    b_cls = jnp.zeros((cls_out, 1), f32)
    b_loc = params["adj_b"].astype(f32)[:, None]

    # joint im2col of the fused search features: rows [0, ckk2) are the cls
    # patches, rows [ckk2, 2*ckk2) the loc patches (selected in the BlockSpec).
    feat_sp = feat[:, :, :hf * wf].reshape(B, 2 * C, hf, wf)
    p_all = _im2col_cm(feat_sp, hk, wk, _round_up(oh * ow, 128))

    cls = xcorr_t(p_all, k_cls.astype(bf16), b_cls, branch=0)    # (B, 2, P_pad)
    loc = xcorr_t(p_all, k_loc.astype(bf16), b_loc, branch=1)    # (B, 4, P_pad)

    cls = cls[:, :, :oh * ow].reshape(B, cls_out, oh, ow)
    loc = loc[:, :, :oh * ow].reshape(B, loc_out, oh, ow)
    return cls, loc


# ---------------------------------------------------------------------------
# Pure-XLA f32 reference (numerical sanity check)
# ---------------------------------------------------------------------------
def _conv_ref(x, w, b):
    out = lax.conv_general_dilated(x, w, (1, 1), "VALID",
                                   dimension_numbers=("NCHW", "OIHW", "NCHW"))
    return out + b[None, :, None, None]


def _xcorr_ref(feat, kern, O):
    B, C = feat.shape[0], feat.shape[1]
    kh, kw = kern.shape[2], kern.shape[3]
    kern_r = kern.reshape(B, O, C, kh, kw)

    def single(f, k):
        return lax.conv_general_dilated(f[None], k, (1, 1), "VALID",
                                        dimension_numbers=("NCHW", "OIHW", "NCHW"))[0]

    return jax.vmap(single)(feat, kern_r)


def _check(name, got, want, tol=0.12):
    got = np.asarray(got, np.float64)
    want = np.asarray(want, np.float64)
    assert got.shape == want.shape, (name, got.shape, want.shape)
    err = np.max(np.abs(got - want)) / (np.std(want) + 1e-6)
    assert err < tol, f"{name}: normalized max abs error {err:.4f} >= {tol}"


if __name__ == "__main__":
    key = jax.random.PRNGKey(0)
    B, C = 2, 32            # feature_in scaled down from 256 for a small example
    cls_out, loc_out = 2, 4
    Hz = Wz = 6             # template feature map
    Hx = Wx = 12            # search feature map

    ks = jax.random.split(key, 12)
    z_f = jax.random.normal(ks[0], (B, C, Hz, Wz), jnp.float32)
    x_f = jax.random.normal(ks[1], (B, C, Hx, Wx), jnp.float32)

    def winit(k, shape):
        fan_in = shape[1] * shape[2] * shape[3]
        return jax.random.normal(k, shape, jnp.float32) / jnp.sqrt(fan_in)

    params = {
        "tcls_w": winit(ks[2], (C * cls_out, C, 3, 3)),
        "tcls_b": jax.random.normal(ks[3], (C * cls_out,), jnp.float32) * 0.1,
        "tloc_w": winit(ks[4], (C * loc_out, C, 3, 3)),
        "tloc_b": jax.random.normal(ks[5], (C * loc_out,), jnp.float32) * 0.1,
        "scls_w": winit(ks[6], (C, C, 3, 3)),
        "scls_b": jax.random.normal(ks[7], (C,), jnp.float32) * 0.1,
        "sloc_w": winit(ks[8], (C, C, 3, 3)),
        "sloc_b": jax.random.normal(ks[9], (C,), jnp.float32) * 0.1,
        "adj_w": winit(ks[10], (loc_out, loc_out, 1, 1)),
        "adj_b": jax.random.normal(ks[11], (loc_out,), jnp.float32) * 0.1,
    }

    cls, loc = jax.jit(upchannel_ban_forward)(params, z_f, x_f)
    jax.block_until_ready((cls, loc))

    # reference (loose tolerance: kernels use bf16 inputs with f32 accumulation)
    ck = _conv_ref(z_f, params["tcls_w"], params["tcls_b"])
    lk = _conv_ref(z_f, params["tloc_w"], params["tloc_b"])
    cf = _conv_ref(x_f, params["scls_w"], params["scls_b"])
    lf = _conv_ref(x_f, params["sloc_w"], params["sloc_b"])
    cls_ref = _xcorr_ref(cf, ck, cls_out)
    loc_x = _xcorr_ref(lf, lk, loc_out)
    loc_ref = (jnp.einsum("oc,bchw->bohw",
                          params["adj_w"].reshape(loc_out, loc_out), loc_x)
               + params["adj_b"][None, :, None, None])

    _check("cls", cls, cls_ref)
    _check("loc", loc, loc_ref)

    print("KERNEL_OK")
</pallas_src>

<mosaic_0001>
module attributes {stable_mosaic.version = 11 : i64} {
  func.func @_conv_gemm_kernel(%arg0: i32, %arg1: i32, %arg2: i32, %arg3: memref<1x288x128xbf16, #tpu.memory_space<vmem>>, %arg4: memref<64x288xbf16, #tpu.memory_space<vmem>>, %arg5: memref<64x1xf32, #tpu.memory_space<vmem>>, %arg6: memref<1x64x128xbf16, #tpu.memory_space<vmem>>) attributes {dimension_semantics = [#tpu.dimension_semantics<parallel>, #tpu.dimension_semantics<parallel>, #tpu.dimension_semantics<parallel>], iteration_bounds = array<i64: 2, 1, 1>, scalar_prefetch = 0 : i64, scratch_operands = 0 : i64, tpu.core_type = #tpu.core_type<tc>, window_params = [{transform_indices = @transform_0, window_bounds = array<i64: 1, 288, 128>}, {transform_indices = @transform_1, window_bounds = array<i64: 64, 288>}, {transform_indices = @transform_2, window_bounds = array<i64: 64, 1>}, {transform_indices = @transform_3, window_bounds = array<i64: 1, 64, 128>}]} {
    %c0 = arith.constant 0 : index
    %c0_0 = arith.constant 0 : index
    %0 = vector.load %arg4[%c0, %c0_0] : memref<64x288xbf16, #tpu.memory_space<vmem>>, vector<64x288xbf16>
    %c0_1 = arith.constant 0 : index
    %c0_2 = arith.constant 0 : index
    %c0_3 = arith.constant 0 : index
    %1 = vector.load %arg3[%c0_1, %c0_2, %c0_3] : memref<1x288x128xbf16, #tpu.memory_space<vmem>>, vector<1x288x128xbf16>
    %2 = vector.shape_cast %1 : vector<1x288x128xbf16> to vector<288x128xbf16>
    %cst = arith.constant dense<0.000000e+00> : vector<64x128xf32>
    %3 = tpu.matmul %0, %2, %cst {dimension_numbers = #tpu.dot_dimension_numbers<[1], [0], [0], [1], [0, 0, 1, 1], [], []>} : vector<64x288xbf16>, vector<288x128xbf16>, vector<64x128xf32> -> vector<64x128xf32>
    %c0_4 = arith.constant 0 : index
    %c0_5 = arith.constant 0 : index
    %4 = vector.load %arg5[%c0_4, %c0_5] : memref<64x1xf32, #tpu.memory_space<vmem>>, vector<64x1xf32>
    %5 = vector.broadcast %4 : vector<64x1xf32> to vector<64x128xf32>
    %6 = arith.addf %3, %5 : vector<64x128xf32>
    %7 = arith.truncf %6 : vector<64x128xf32> to vector<64x128xbf16>
    %c0_6 = arith.constant 0 : index
    %c0_7 = arith.constant 0 : index
    %c0_8 = arith.constant 0 : index
    %8 = vector.load %arg6[%c0_6, %c0_7, %c0_8] : memref<1x64x128xbf16, #tpu.memory_space<vmem>>, vector<1x64x128xbf16>
    %9 = vector.shape_cast %8 : vector<1x64x128xbf16> to vector<64x128xbf16>
    %10 = vector.shape_cast %7 : vector<64x128xbf16> to vector<1x64x128xbf16>
    tpu.vector_store %arg6[%c0_6, %c0_7, %c0_8], %10 {strides = array<i32>} : memref<1x64x128xbf16, #tpu.memory_space<vmem>>, vector<1x64x128xbf16>,
    return
  }
  func.func @transform_0(%arg0: i32, %arg1: i32, %arg2: i32) -> (i32, i32, i32) {
    %c0_i32 = arith.constant 0 : i32
    %c0_i32_0 = arith.constant 0 : i32
    return %arg0, %c0_i32, %arg2 : i32, i32, i32
  }
  func.func @transform_1(%arg0: i32, %arg1: i32, %arg2: i32) -> (i32, i32) {
    %c0_i32 = arith.constant 0 : i32
    %c0_i32_0 = arith.constant 0 : i32
    return %arg1, %c0_i32 : i32, i32
  }
  func.func @transform_2(%arg0: i32, %arg1: i32, %arg2: i32) -> (i32, i32) {
    %c0_i32 = arith.constant 0 : i32
    %c0_i32_0 = arith.constant 0 : i32
    return %arg1, %c0_i32 : i32, i32
  }
  func.func @transform_3(%arg0: i32, %arg1: i32, %arg2: i32) -> (i32, i32, i32) {
    %c0_i32 = arith.constant 0 : i32
    return %arg0, %arg1, %arg2 : i32, i32, i32
  }
}

module attributes {stable_mosaic.version = 11 : i64} {
  func.func @_conv_gemm_kernel(%arg0: i32, %arg1: i32, %arg2: i32, %arg3: memref<1x288x128xbf16, #tpu.memory_space<vmem>>, %arg4: memref<192x288xbf16, #tpu.memory_space<vmem>>, %arg5: memref<192x1xf32, #tpu.memory_space<vmem>>, %arg6: memref<1x192x128xbf16, #tpu.memory_space<vmem>>) attributes {dimension_semantics = [#tpu.dimension_semantics<parallel>, #tpu.dimension_semantics<parallel>, #tpu.dimension_semantics<parallel>], iteration_bounds = array<i64: 2, 1, 1>, scalar_prefetch = 0 : i64, scratch_operands = 0 : i64, tpu.core_type = #tpu.core_type<tc>, window_params = [{transform_indices = @transform_0, window_bounds = array<i64: 1, 288, 128>}, {transform_indices = @transform_1, window_bounds = array<i64: 192, 288>}, {transform_indices = @transform_2, window_bounds = array<i64: 192, 1>}, {transform_indices = @transform_3, window_bounds = array<i64: 1, 192, 128>}]} {
    %c0 = arith.constant 0 : index
    %c0_0 = arith.constant 0 : index
    %0 = vector.load %arg4[%c0, %c0_0] : memref<192x288xbf16, #tpu.memory_space<vmem>>, vector<192x288xbf16>
    %c0_1 = arith.constant 0 : index
    %c0_2 = arith.constant 0 : index
    %c0_3 = arith.constant 0 : index
    %1 = vector.load %arg3[%c0_1, %c0_2, %c0_3] : memref<1x288x128xbf16, #tpu.memory_space<vmem>>, vector<1x288x128xbf16>
    %2 = vector.shape_cast %1 : vector<1x288x128xbf16> to vector<288x128xbf16>
    %cst = arith.constant dense<0.000000e+00> : vector<192x128xf32>
    %3 = tpu.matmul %0, %2, %cst {dimension_numbers = #tpu.dot_dimension_numbers<[1], [0], [0], [1], [0, 0, 1, 1], [], []>} : vector<192x288xbf16>, vector<288x128xbf16>, vector<192x128xf32> -> vector<192x128xf32>
    %c0_4 = arith.constant 0 : index
    %c0_5 = arith.constant 0 : index
    %4 = vector.load %arg5[%c0_4, %c0_5] : memref<192x1xf32, #tpu.memory_space<vmem>>, vector<192x1xf32>
    %5 = vector.broadcast %4 : vector<192x1xf32> to vector<192x128xf32>
    %6 = arith.addf %3, %5 : vector<192x128xf32>
    %7 = arith.truncf %6 : vector<192x128xf32> to vector<192x128xbf16>
    %c0_6 = arith.constant 0 : index
    %c0_7 = arith.constant 0 : index
    %c0_8 = arith.constant 0 : index
    %8 = vector.load %arg6[%c0_6, %c0_7, %c0_8] : memref<1x192x128xbf16, #tpu.memory_space<vmem>>, vector<1x192x128xbf16>
    %9 = vector.shape_cast %8 : vector<1x192x128xbf16> to vector<192x128xbf16>
    %10 = vector.shape_cast %7 : vector<192x128xbf16> to vector<1x192x128xbf16>
    tpu.vector_store %arg6[%c0_6, %c0_7, %c0_8], %10 {strides = array<i32>} : memref<1x192x128xbf16, #tpu.memory_space<vmem>>, vector<1x192x128xbf16>,
    return
  }
  func.func @transform_0(%arg0: i32, %arg1: i32, %arg2: i32) -> (i32, i32, i32) {
    %c0_i32 = arith.constant 0 : i32
    %c0_i32_0 = arith.constant 0 : i32
    return %arg0, %c0_i32, %arg2 : i32, i32, i32
  }
  func.func @transform_1(%arg0: i32, %arg1: i32, %arg2: i32) -> (i32, i32) {
    %c0_i32 = arith.constant 0 : i32
    %c0_i32_0 = arith.constant 0 : i32
    return %arg1, %c0_i32 : i32, i32
  }
  func.func @transform_2(%arg0: i32, %arg1: i32, %arg2: i32) -> (i32, i32) {
    %c0_i32 = arith.constant 0 : i32
    %c0_i32_0 = arith.constant 0 : i32
    return %arg1, %c0_i32 : i32, i32
  }
  func.func @transform_3(%arg0: i32, %arg1: i32, %arg2: i32) -> (i32, i32, i32) {
    %c0_i32 = arith.constant 0 : i32
    return %arg0, %arg1, %arg2 : i32, i32, i32
  }
}

module attributes {stable_mosaic.version = 11 : i64} {
  func.func @_xcorr_kernel(%arg0: i32, %arg1: i32, %arg2: memref<1x512x128xbf16, #tpu.memory_space<vmem>>, %arg3: memref<1x4x512xbf16, #tpu.memory_space<vmem>>, %arg4: memref<4x1xf32, #tpu.memory_space<vmem>>, %arg5: memref<1x4x128xf32, #tpu.memory_space<vmem>>) attributes {dimension_semantics = [#tpu.dimension_semantics<parallel>, #tpu.dimension_semantics<parallel>], iteration_bounds = array<i64: 2, 1>, scalar_prefetch = 0 : i64, scratch_operands = 0 : i64, tpu.core_type = #tpu.core_type<tc>, window_params = [{transform_indices = @transform_0, window_bounds = array<i64: 1, 512, 128>}, {transform_indices = @transform_1, window_bounds = array<i64: 1, 4, 512>}, {pipeline_mode = #tpu.pipeline_mode<synchronous>, transform_indices = @transform_2, window_bounds = array<i64: 4, 1>}, {transform_indices = @transform_3, window_bounds = array<i64: 1, 4, 128>}]} {
    %c0 = arith.constant 0 : index
    %c0_0 = arith.constant 0 : index
    %c0_1 = arith.constant 0 : index
    %0 = vector.load %arg3[%c0, %c0_0, %c0_1] : memref<1x4x512xbf16, #tpu.memory_space<vmem>>, vector<1x4x512xbf16>
    %1 = vector.shape_cast %0 : vector<1x4x512xbf16> to vector<4x512xbf16>
    %c0_2 = arith.constant 0 : index
    %c0_3 = arith.constant 0 : index
    %c0_4 = arith.constant 0 : index
    %2 = vector.load %arg2[%c0_2, %c0_3, %c0_4] : memref<1x512x128xbf16, #tpu.memory_space<vmem>>, vector<1x512x128xbf16>
    %3 = vector.shape_cast %2 : vector<1x512x128xbf16> to vector<512x128xbf16>
    %cst = arith.constant dense<0.000000e+00> : vector<4x128xf32>
    %4 = tpu.matmul %1, %3, %cst {dimension_numbers = #tpu.dot_dimension_numbers<[1], [0], [0], [1], [0, 0, 1, 1], [], []>} : vector<4x512xbf16>, vector<512x128xbf16>, vector<4x128xf32> -> vector<4x128xf32>
    %c0_5 = arith.constant 0 : index
    %c0_6 = arith.constant 0 : index
    %5 = vector.load %arg4[%c0_5, %c0_6] : memref<4x1xf32, #tpu.memory_space<vmem>>, vector<4x1xf32>
    %6 = vector.broadcast %5 : vector<4x1xf32> to vector<4x128xf32>
    %7 = arith.addf %4, %6 : vector<4x128xf32>
    %c0_7 = arith.constant 0 : index
    %c0_8 = arith.constant 0 : index
    %c0_9 = arith.constant 0 : index
    %8 = vector.load %arg5[%c0_7, %c0_8, %c0_9] : memref<1x4x128xf32, #tpu.memory_space<vmem>>, vector<1x4x128xf32>
    %9 = vector.shape_cast %8 : vector<1x4x128xf32> to vector<4x128xf32>
    %10 = vector.shape_cast %7 : vector<4x128xf32> to vector<1x4x128xf32>
    tpu.vector_store %arg5[%c0_7, %c0_8, %c0_9], %10 {strides = array<i32>} : memref<1x4x128xf32, #tpu.memory_space<vmem>>, vector<1x4x128xf32>,
    return
  }
  func.func @transform_0(%arg0: i32, %arg1: i32) -> (i32, i32, i32) {
    %c1_i32 = arith.constant 1 : i32
    %c0_i32 = arith.constant 0 : i32
    return %arg0, %c1_i32, %arg1 : i32, i32, i32
  }
  func.func @transform_1(%arg0: i32, %arg1: i32) -> (i32, i32, i32) {
    %c0_i32 = arith.constant 0 : i32
    %c0_i32_0 = arith.constant 0 : i32
    %c0_i32_1 = arith.constant 0 : i32
    return %arg0, %c0_i32, %c0_i32_0 : i32, i32, i32
  }
  func.func @transform_2(%arg0: i32, %arg1: i32) -> (i32, i32) {
    %c0_i32 = arith.constant 0 : i32
    %c0_i32_0 = arith.constant 0 : i32
    %c0_i32_1 = arith.constant 0 : i32
    return %c0_i32, %c0_i32_0 : i32, i32
  }
  func.func @transform_3(%arg0: i32, %arg1: i32) -> (i32, i32, i32) {
    %c0_i32 = arith.constant 0 : i32
    %c0_i32_0 = arith.constant 0 : i32
    return %arg0, %c0_i32, %arg1 : i32, i32, i32
  }
}

module attributes {stable_mosaic.version = 11 : i64} {
  func.func @_xcorr_kernel(%arg0: i32, %arg1: i32, %arg2: memref<1x512x128xbf16, #tpu.memory_space<vmem>>, %arg3: memref<1x2x512xbf16, #tpu.memory_space<vmem>>, %arg4: memref<2x1xf32, #tpu.memory_space<vmem>>, %arg5: memref<1x2x128xf32, #tpu.memory_space<vmem>>) attributes {dimension_semantics = [#tpu.dimension_semantics<parallel>, #tpu.dimension_semantics<parallel>], iteration_bounds = array<i64: 2, 1>, scalar_prefetch = 0 : i64, scratch_operands = 0 : i64, tpu.core_type = #tpu.core_type<tc>, window_params = [{transform_indices = @transform_0, window_bounds = array<i64: 1, 512, 128>}, {transform_indices = @transform_1, window_bounds = array<i64: 1, 2, 512>}, {pipeline_mode = #tpu.pipeline_mode<synchronous>, transform_indices = @transform_2, window_bounds = array<i64: 2, 1>}, {transform_indices = @transform_3, window_bounds = array<i64: 1, 2, 128>}]} {
    %c0 = arith.constant 0 : index
    %c0_0 = arith.constant 0 : index
    %c0_1 = arith.constant 0 : index
    %0 = vector.load %arg3[%c0, %c0_0, %c0_1] : memref<1x2x512xbf16, #tpu.memory_space<vmem>>, vector<1x2x512xbf16>
    %1 = vector.shape_cast %0 : vector<1x2x512xbf16> to vector<2x512xbf16>
    %c0_2 = arith.constant 0 : index
    %c0_3 = arith.constant 0 : index
    %c0_4 = arith.constant 0 : index
    %2 = vector.load %arg2[%c0_2, %c0_3, %c0_4] : memref<1x512x128xbf16, #tpu.memory_space<vmem>>, vector<1x512x128xbf16>
    %3 = vector.shape_cast %2 : vector<1x512x128xbf16> to vector<512x128xbf16>
    %cst = arith.constant dense<0.000000e+00> : vector<2x128xf32>
    %4 = tpu.matmul %1, %3, %cst {dimension_numbers = #tpu.dot_dimension_numbers<[1], [0], [0], [1], [0, 0, 1, 1], [], []>} : vector<2x512xbf16>, vector<512x128xbf16>, vector<2x128xf32> -> vector<2x128xf32>
    %c0_5 = arith.constant 0 : index
    %c0_6 = arith.constant 0 : index
    %5 = vector.load %arg4[%c0_5, %c0_6] : memref<2x1xf32, #tpu.memory_space<vmem>>, vector<2x1xf32>
    %6 = vector.broadcast %5 : vector<2x1xf32> to vector<2x128xf32>
    %7 = arith.addf %4, %6 : vector<2x128xf32>
    %c0_7 = arith.constant 0 : index
    %c0_8 = arith.constant 0 : index
    %c0_9 = arith.constant 0 : index
    %8 = vector.load %arg5[%c0_7, %c0_8, %c0_9] : memref<1x2x128xf32, #tpu.memory_space<vmem>>, vector<1x2x128xf32>
    %9 = vector.shape_cast %8 : vector<1x2x128xf32> to vector<2x128xf32>
    %10 = vector.shape_cast %7 : vector<2x128xf32> to vector<1x2x128xf32>
    tpu.vector_store %arg5[%c0_7, %c0_8, %c0_9], %10 {strides = array<i32>} : memref<1x2x128xf32, #tpu.memory_space<vmem>>, vector<1x2x128xf32>,
    return
  }
  func.func @transform_0(%arg0: i32, %arg1: i32) -> (i32, i32, i32) {
    %c0_i32 = arith.constant 0 : i32
    %c0_i32_0 = arith.constant 0 : i32
    return %arg0, %c0_i32, %arg1 : i32, i32, i32
  }
  func.func @transform_1(%arg0: i32, %arg1: i32) -> (i32, i32, i32) {
    %c0_i32 = arith.constant 0 : i32
    %c0_i32_0 = arith.constant 0 : i32
    %c0_i32_1 = arith.constant 0 : i32
    return %arg0, %c0_i32, %c0_i32_0 : i32, i32, i32
  }
  func.func @transform_2(%arg0: i32, %arg1: i32) -> (i32, i32) {
    %c0_i32 = arith.constant 0 : i32
    %c0_i32_0 = arith.constant 0 : i32
    %c0_i32_1 = arith.constant 0 : i32
    return %c0_i32, %c0_i32_0 : i32, i32
  }
  func.func @transform_3(%arg0: i32, %arg1: i32) -> (i32, i32, i32) {
    %c0_i32 = arith.constant 0 : i32
    %c0_i32_0 = arith.constant 0 : i32
    return %arg0, %c0_i32, %arg1 : i32, i32, i32
  }
}

</mosaic_0001>

<llo_original>
// kernel: upchannel_ban_forward.5
$region0: #{upchannel_ban_forward.5}
  #allocation0 [shape = 'u32[]', space=smem, size = 0x4, offset = 0x4, fixed_abs, tag = 'smem constant byte address 0x4 - core index']
  #allocation1 [shape = 'u32[144,128]{1,0:T(1,128)}', space=vmem, size = 0x12000, scoped, tag = 'internal scratch']
  %s0 = inlined_call_operand.vmem [shape: bf16[2,288,128], index: 0, kind: input, shape index: {}]
  %s1 = inlined_call_operand.vmem [shape: bf16[64,288], index: 1, kind: input, shape index: {}]
  %s2 = inlined_call_operand.vmem [shape: f32[64,1], index: 2, kind: input, shape index: {}]
  %s3 = inlined_call_operand.vmem [shape: bf16[2,64,128], index: 3, kind: output, shape index: {}]
  %s4 = sld [smem:[#allocation0]]
  $region45: #{upchannel_ban_forward.5} parent=0
    _
  %s6 = ssub.s32 1, %s4
  %s7 = scalar_select 0, %s6, %s4
  loop: start=0, step=1, limit=4
  $region2: #{upchannel_ban_forward.5} parent=0 // loop_pre_header
    _
  $region3: #{upchannel_ban_forward.5} parent=0 // loop_header
    %s9 = sphi 0, %s13
    %p10 = scmp.ge.s32.totalorder %s9, 4
    %s16 = sphi 0, %s35
    %s17 = sphi 0, %s31
    %s18 = sphi 0, %s27
    %s19 = sphi 0, %s16
    %s20 = sphi 0, %s17
    %s21 = sphi 0, %s18
    %s22 = sphi 0, %s19
    %s23 = sphi 0, %s20
    %s24 = sphi 0, %s21
    %s40 = sphi 0, %s42
    %s43 = sphi 0, %s40
    %s44 = sphi 0, %s43
    %s60 = sphi 0, %s44
    %s66 = sphi 0, %s68
    %s69 = sphi 0, %s66
    %s70 = sphi 0, %s69
    %s86 = sphi 0, %s70
    %s92 = sphi 0, %s94
    %s95 = sphi 0, %s92
    %s96 = sphi 0, %s95
    %s112 = sphi 0, %s96
    %s122 = sphi 0, %s124
    %s125 = sphi 0, %s122
    %s126 = sphi 0, %s125
    %s142 = sphi 0, %s126
  $region4: #{upchannel_ban_forward.5} parent=0 // loop_header_branch
    %12 = sbr.rel (%p10) target = $region8
  $region5: #{upchannel_ban_forward.5} parent=0 // loop_body
    %s14 = ssub.s32 %s9, 1
    %s15 = ssub.s32 %s9, 2
    %s25 = sadd.s32 1, %s18
    %p26 = scmp.ge.s32.totalorder %s25, 1
    %s27 = scalar_select %p26, 0, %s25
    %s28 = sadd.s32 1, %s17
    %s29 = scalar_select %p26, %s28, %s17
    %p30 = scmp.ge.s32.totalorder %s29, 1
    %s31 = scalar_select %p30, 0, %s29
    %s32 = sadd.s32 1, %s16
    %s33 = scalar_select %p30, %s32, %s16
    %p34 = scmp.ge.s32.totalorder %s33, 2
    %s35 = scalar_select %p34, 0, %s33
    %s36 = ssub.s32 %s16, %s35
    %s37 = ssub.s32 %s18, %s27
    %s38 = sor.u32 %s36, %s37
    %p39 = scmp.eq.s32.totalorder %s38, 0
    %s41 = sadd.s32 %s40, 1
    %s42 = scalar_select %p39, %s40, %s41
    %p45 = pneg %p39
    %p46 = scmp.eq.s32.totalorder %s9, 1
    %p47 = por %p45, %p46
    %p48 = scmp.ne.s32.totalorder %s40, %s43
    %p49 = scmp.eq.s32.totalorder %s9, 0
    %p50 = por %p48, %p49
    %p51 = scmp.ne.s32.totalorder %s40, %s43
    %p52 = scmp.eq.s32.totalorder %s14, 1
    %p53 = por %p51, %p52
    %p54 = scmp.ne.s32.totalorder %s43, %s44
    %p55 = scmp.eq.s32.totalorder %s14, 0
    %p56 = por %p54, %p55
    %p57 = scmp.ne.s32.totalorder %s43, %s44
    %p58 = scmp.eq.s32.totalorder %s15, 1
    %p59 = por %p57, %p58
    %p61 = scmp.ne.s32.totalorder %s44, %s60
    %p62 = scmp.eq.s32.totalorder %s15, 0
    %p63 = por %p61, %p62
    %s64 = ssub.s32 %s17, %s31
    %p65 = scmp.eq.s32.totalorder %s64, 0
    %s67 = sadd.s32 %s66, 1
    %s68 = scalar_select %p65, %s66, %s67
    %p71 = pneg %p65
    %p72 = scmp.eq.s32.totalorder %s9, 1
    %p73 = por %p71, %p72
    %p74 = scmp.ne.s32.totalorder %s66, %s69
    %p75 = scmp.eq.s32.totalorder %s9, 0
    %p76 = por %p74, %p75
    %p77 = scmp.ne.s32.totalorder %s66, %s69
    %p78 = scmp.eq.s32.totalorder %s14, 1
    %p79 = por %p77, %p78
    %p80 = scmp.ne.s32.totalorder %s69, %s70
    %p81 = scmp.eq.s32.totalorder %s14, 0
    %p82 = por %p80, %p81
    %p83 = scmp.ne.s32.totalorder %s69, %s70
    %p84 = scmp.eq.s32.totalorder %s15, 1
    %p85 = por %p83, %p84
    %p87 = scmp.ne.s32.totalorder %s70, %s86
    %p88 = scmp.eq.s32.totalorder %s15, 0
    %p89 = por %p87, %p88
    %s90 = ssub.s32 %s17, %s31
    %p91 = scmp.eq.s32.totalorder %s90, 0
    %s93 = sadd.s32 %s92, 1
    %s94 = scalar_select %p91, %s92, %s93
    %p97 = pneg %p91
    %p98 = scmp.eq.s32.totalorder %s9, 1
    %p99 = por %p97, %p98
    %p100 = scmp.ne.s32.totalorder %s92, %s95
    %p101 = scmp.eq.s32.totalorder %s9, 0
    %p102 = por %p100, %p101
    %p103 = scmp.ne.s32.totalorder %s92, %s95
    %p104 = scmp.eq.s32.totalorder %s14, 1
    %p105 = por %p103, %p104
    %p106 = scmp.ne.s32.totalorder %s95, %s96
    %p107 = scmp.eq.s32.totalorder %s14, 0
    %p108 = por %p106, %p107
    %p109 = scmp.ne.s32.totalorder %s95, %s96
    %p110 = scmp.eq.s32.totalorder %s15, 1
    %p111 = por %p109, %p110
    %p113 = scmp.ne.s32.totalorder %s96, %s112
    %p114 = scmp.eq.s32.totalorder %s15, 0
    %p115 = por %p113, %p114
    %s116 = ssub.s32 %s16, %s35
    %s117 = ssub.s32 %s17, %s31
    %s118 = sor.u32 %s116, %s117
    %s119 = ssub.s32 %s18, %s27
    %s120 = sor.u32 %s118, %s119
    %p121 = scmp.eq.s32.totalorder %s120, 0
    %s123 = sadd.s32 %s122, 1
    %s124 = scalar_select %p121, %s122, %s123
    %p127 = pneg %p121
    %p128 = scmp.eq.s32.totalorder %s9, 1
    %p129 = por %p127, %p128
    %p130 = scmp.ne.s32.totalorder %s122, %s125
    %p131 = scmp.eq.s32.totalorder %s9, 0
    %p132 = por %p130, %p131
    %p133 = scmp.ne.s32.totalorder %s122, %s125
    %p134 = scmp.eq.s32.totalorder %s14, 1
    %p135 = por %p133, %p134
    %p136 = scmp.ne.s32.totalorder %s125, %s126
    %p137 = scmp.eq.s32.totalorder %s14, 0
    %p138 = por %p136, %p137
    %p139 = scmp.ne.s32.totalorder %s125, %s126
    %p140 = scmp.eq.s32.totalorder %s15, 1
    %p141 = por %p139, %p140
    %p143 = scmp.ne.s32.totalorder %s126, %s142
    %p144 = scmp.eq.s32.totalorder %s15, 0
    %p145 = por %p143, %p144
    %p146 = scmp.le.s32.totalorder 1, %s9
    %p147 = scmp.lt.s32.totalorder %s9, 3
    %p148 = pnand %p146, %p147
    %p149 = pneg %p148
    // Predicated region
    $region9: #{upchannel_ban_forward.5} parent=5 // pred_check
      _
    $region10: #{upchannel_ban_forward.5} parent=5 // pred_check_branch
      %151 = sbr.rel (%p148) target = $region12
    $region11: #{upchannel_ban_forward.5} parent=5 // pred_region
      %s152 = ssub.s32 %s9, 1
      // Predicated region
      $region13: #{upchannel_ban_forward.5} parent=11 // pred_check
        %p153 = pneg %p82
      $region14: #{upchannel_ban_forward.5} parent=11 // pred_check_branch
        %155 = sbr.rel (%p153) target = $region16
      $region15: #{upchannel_ban_forward.5} parent=11 // pred_region
        %s156 = smul.u32 8, %s20
        %p157 = scmp.lt.s32.totalorder %s156, 7
        %s158 = scalar_select %p157, %s156, 7
        %s159 = smul.addr %s158, 3
        %s160 = smul.addr %s159, 4
        %s161 = scalar_lea.vmem %s1, %s160
        %s162 = smul.u32 8, %s20
      $region16: #{upchannel_ban_forward.5} parent=11 // pred_fallthru
        _
      // Predicated region
      $region17: #{upchannel_ban_forward.5} parent=11 // pred_check
        %p163 = pneg %p108
      $region18: #{upchannel_ban_forward.5} parent=11 // pred_check_branch
        %165 = sbr.rel (%p163) target = $region20
      $region19: #{upchannel_ban_forward.5} parent=11 // pred_region
        %s166 = smul.u32 8, %s20
        %p167 = scmp.lt.s32.totalorder %s166, 7
        %s168 = scalar_select %p167, %s166, 7
        %s169 = smul.addr %s168, 8
        %s170 = scalar_lea.vmem %s2, %s169
        %s171 = smul.u32 8, %s20
      $region20: #{upchannel_ban_forward.5} parent=11 // pred_fallthru
        _
    $region12: #{upchannel_ban_forward.5} parent=5 // pred_fallthru
      _
    %p172 = scmp.lt.s32.totalorder %s9, 2
    // Predicated region
    $region21: #{upchannel_ban_forward.5} parent=5 // pred_check
      %p173 = pneg %p172
    $region22: #{upchannel_ban_forward.5} parent=5 // pred_check_branch
      %175 = sbr.rel (%p173) target = $region24
    $region23: #{upchannel_ban_forward.5} parent=5 // pred_region
      // Predicated region
      $region25: #{upchannel_ban_forward.5} parent=23 // pred_check
        %p176 = pneg %p50
      $region26: #{upchannel_ban_forward.5} parent=23 // pred_check_branch
        %178 = sbr.rel (%p176) target = $region28
      $region27: #{upchannel_ban_forward.5} parent=23 // pred_region
        %p179 = scmp.lt.s32.totalorder %s16, 1
        %s180 = scalar_select %p179, %s16, 1
        %p181 = scmp.lt.s32.totalorder %s18, 0
        %s182 = scalar_select %p181, %s18, 0
        %s183 = smul.addr %s180, 36
        %s184 = sadd.s32 %s182, %s183
        %s185 = smul.addr %s184, 4
        %s186 = scalar_lea.vmem %s0, %s185
      $region28: #{upchannel_ban_forward.5} parent=23 // pred_fallthru
        _
    $region24: #{upchannel_ban_forward.5} parent=5 // pred_fallthru
      _
    %p187 = scmp.le.s32.totalorder 1, %s9
    %p188 = scmp.lt.s32.totalorder %s9, 3
    %p189 = pnand %p187, %p188
    %p190 = pneg %p189
    // Predicated region
    $region29: #{upchannel_ban_forward.5} parent=5 // pred_check
      _
    $region30: #{upchannel_ban_forward.5} parent=5 // pred_check_branch
      %192 = sbr.rel (%p189) target = $region32
    $region31: #{upchannel_ban_forward.5} parent=5 // pred_region
      %s193 = ssub.s32 %s9, 1
      %p194 = scmp.lt.s32.totalorder %s19, 1
      %s195 = scalar_select %p194, %s19, 1
      %p196 = scmp.lt.s32.totalorder %s21, 0
      %s197 = scalar_select %p196, %s21, 0
      %s198 = smul.addr %s195, 36
      %s199 = sadd.s32 %s197, %s198
      %s200 = smul.addr %s199, 4
      %s201 = scalar_lea.vmem %s0, %s200
      %p202 = pneg %p56
      %p203 = pneg %p53
      %s204 = smul.u32 8, %s20
      %p205 = scmp.lt.s32.totalorder %s204, 7
      %s206 = scalar_select %p205, %s204, 7
      %s207 = smul.addr %s206, 3
      %s208 = smul.addr %s207, 4
      %s209 = scalar_lea.vmem %s1, %s208
      %p210 = pneg %p82
      %p211 = pneg %p79
      %s212 = smul.u32 8, %s20
      %p213 = scmp.lt.s32.totalorder %s212, 7
      %s214 = scalar_select %p213, %s212, 7
      %s215 = smul.addr %s214, 8
      %s216 = scalar_lea.vmem %s2, %s215
      %p217 = pneg %p108
      %p218 = pneg %p105
      %p219 = pneg %p138
      %p220 = pneg %p135
      %s221 = smul.u32 8, %s20
      %p222 = scmp.lt.s32.totalorder %s19, 1
      %s223 = scalar_select %p222, %s19, 1
      %p224 = scmp.lt.s32.totalorder %s221, 7
      %s225 = scalar_select %p224, %s221, 7
      %p226 = scmp.lt.s32.totalorder %s21, 0
      %s227 = scalar_select %p226, %s21, 0
      %s228 = sadd.s32 %s227, %s225
      %s229 = smul.addr %s223, 8
      %s230 = sadd.s32 %s228, %s229
      %s231 = smul.addr %s230, 4
      %s232 = scalar_lea.vmem %s3, %s231
      %p233 = scmp.lt.s32.totalorder %s19, 1
      %s234 = scalar_select %p233, %s19, 1
      %p235 = scmp.lt.s32.totalorder %s21, 0
      %s236 = scalar_select %p235, %s21, 0
      %s237 = smul.addr %s234, 36
      %s238 = sadd.s32 %s236, %s237
      %s239 = smul.addr %s238, 4
      %s240 = scalar_lea.vmem %s0, %s239
      %s241 = smul.u32 8, %s20
      %p242 = scmp.lt.s32.totalorder %s241, 7
      %s243 = scalar_select %p242, %s241, 7
      %s244 = smul.addr %s243, 3
      %s245 = smul.addr %s244, 4
      %s246 = scalar_lea.vmem %s1, %s245
      %s247 = smul.u32 8, %s20
      %s248 = smul.u32 8, %s20
      %p249 = scmp.lt.s32.totalorder %s248, 7
      %s250 = scalar_select %p249, %s248, 7
      %s251 = smul.addr %s250, 8
      %s252 = scalar_lea.vmem %s2, %s251
      %s253 = smul.u32 8, %s20
      %s254 = smul.u32 8, %s20
      %p255 = scmp.lt.s32.totalorder %s19, 1
      %s256 = scalar_select %p255, %s19, 1
      %p257 = scmp.lt.s32.totalorder %s254, 7
      %s258 = scalar_select %p257, %s254, 7
      %p259 = scmp.lt.s32.totalorder %s21, 0
      %s260 = scalar_select %p259, %s21, 0
      %s261 = sadd.s32 %s260, %s258
      %s262 = smul.addr %s256, 8
      %s263 = sadd.s32 %s261, %s262
      %s264 = smul.addr %s263, 4
      %s265 = scalar_lea.vmem %s3, %s264
      %s266 = smul.u32 8, %s20
      %v268 = vld [vmem:[%s246] sm:$0xff]
      %v269 = vld [vmem:[%s246 + $0x8] sm:$0xf]
      %v270 = vld [vmem:[%s246 + $0xc] sm:$0xff]
      %v271 = vld [vmem:[%s246 + $0x14] sm:$0xf]
      %v272 = vld [vmem:[%s246 + $0x18] sm:$0xff]
      %v273 = vld [vmem:[%s246 + $0x20] sm:$0xf]
      %v274 = vld [vmem:[%s246 + $0x24] sm:$0xff]
      %v275 = vld [vmem:[%s246 + $0x2c] sm:$0xf]
      %v276 = vld [vmem:[%s246 + $0x30] sm:$0xff]
      %v277 = vld [vmem:[%s246 + $0x38] sm:$0xf]
      %v278 = vld [vmem:[%s246 + $0x3c] sm:$0xff]
      %v279 = vld [vmem:[%s246 + $0x44] sm:$0xf]
      %v280 = vld [vmem:[%s246 + $0x48] sm:$0xff]
      %v281 = vld [vmem:[%s246 + $0x50] sm:$0xf]
      %v282 = vld [vmem:[%s246 + $0x54] sm:$0xff]
      %v283 = vld [vmem:[%s246 + $0x5c] sm:$0xf]
      %v284 = vld [vmem:[%s240] sm:$0xf]
      %v285 = vld [vmem:[%s240 + $0x4] sm:$0xf]
      %v286 = vld [vmem:[%s240 + $0x8] sm:$0xf]
      %v287 = vld [vmem:[%s240 + $0xc] sm:$0xf]
      %v288 = vld [vmem:[%s240 + $0x10] sm:$0xf]
      %v289 = vld [vmem:[%s240 + $0x14] sm:$0xf]
      %v290 = vld [vmem:[%s240 + $0x18] sm:$0xf]
      %v291 = vld [vmem:[%s240 + $0x1c] sm:$0xf]
      %v292 = vld [vmem:[%s240 + $0x20] sm:$0xf]
      %v293 = vld [vmem:[%s240 + $0x24] sm:$0xf]
      %v294 = vld [vmem:[%s240 + $0x28] sm:$0xf]
      %v295 = vld [vmem:[%s240 + $0x2c] sm:$0xf]
      %v296 = vld [vmem:[%s240 + $0x30] sm:$0xf]
      %v297 = vld [vmem:[%s240 + $0x34] sm:$0xf]
      %v298 = vld [vmem:[%s240 + $0x38] sm:$0xf]
      %v299 = vld [vmem:[%s240 + $0x3c] sm:$0xf]
      %v300 = vld [vmem:[%s240 + $0x40] sm:$0xf]
      %v301 = vld [vmem:[%s240 + $0x44] sm:$0xf]
      %v302 = vld [vmem:[%s240 + $0x48] sm:$0xf]
      %v303 = vld [vmem:[%s240 + $0x4c] sm:$0xf]
      %v304 = vld [vmem:[%s240 + $0x50] sm:$0xf]
      %v305 = vld [vmem:[%s240 + $0x54] sm:$0xf]
      %v306 = vld [vmem:[%s240 + $0x58] sm:$0xf]
      %v307 = vld [vmem:[%s240 + $0x5c] sm:$0xf]
      %v308 = vld [vmem:[%s240 + $0x60] sm:$0xf]
      %v309 = vld [vmem:[%s240 + $0x64] sm:$0xf]
      %v310 = vld [vmem:[%s240 + $0x68] sm:$0xf]
      %v311 = vld [vmem:[%s240 + $0x6c] sm:$0xf]
      %v312 = vld [vmem:[%s240 + $0x70] sm:$0xf]
      %v313 = vld [vmem:[%s240 + $0x74] sm:$0xf]
      %v314 = vld [vmem:[%s240 + $0x78] sm:$0xf]
      %v315 = vld [vmem:[%s240 + $0x7c] sm:$0xf]
      %v316 = vld [vmem:[%s240 + $0x80] sm:$0xf]
      %v317 = vld [vmem:[%s240 + $0x84] sm:$0xf]
      %v318 = vld [vmem:[%s240 + $0x88] sm:$0xf]
      %v319 = vld [vmem:[%s240 + $0x8c] sm:$0xf]
      %v320 = vld [vmem:[%s252] sm:$0xff]
      %v321 = vld [vmem:[%s252 + $0x8] sm:$0xff]
      %v322 = vld [vmem:[%s252 + $0x10] sm:$0xff]
      %v323 = vld [vmem:[%s252 + $0x18] sm:$0xff]
      %v324 = vld [vmem:[%s252 + $0x20] sm:$0xff]
      %v325 = vld [vmem:[%s252 + $0x28] sm:$0xff]
      %v326 = vld [vmem:[%s252 + $0x30] sm:$0xff]
      %v327 = vld [vmem:[%s252 + $0x38] sm:$0xff]
      %329 = vset.pattern.permute.xlu0 0
      %330 = vperm.xlu0 %329, %v320
      %v331 = vpop.permute.xlu0 %330
      %334 = vset.pattern.permute.xlu0 0
      %335 = vperm.xlu0 %334, %v321
      %v336 = vpop.permute.xlu0 %335
      %339 = vset.pattern.permute.xlu0 0
      %340 = vperm.xlu0 %339, %v322
      %v341 = vpop.permute.xlu0 %340
      %344 = vset.pattern.permute.xlu0 0
      %345 = vperm.xlu0 %344, %v323
      %v346 = vpop.permute.xlu0 %345
      %349 = vset.pattern.permute.xlu0 0
      %350 = vperm.xlu0 %349, %v324
      %v351 = vpop.permute.xlu0 %350
      %354 = vset.pattern.permute.xlu0 0
      %355 = vperm.xlu0 %354, %v325
      %v356 = vpop.permute.xlu0 %355
      %359 = vset.pattern.permute.xlu0 0
      %360 = vperm.xlu0 %359, %v326
      %v361 = vpop.permute.xlu0 %360
      %364 = vset.pattern.permute.xlu0 0
      %365 = vperm.xlu0 %364, %v327
      %v366 = vpop.permute.xlu0 %365
      %v384 = vunpack.c.l.b16 %v268
      %v385 = vunpack.c.h.b16 %v268
      %v386 = vunpack.c.l.b16 %v269
      %v387 = vunpack.c.l.b16 %v270
      %v388 = vunpack.c.h.b16 %v270
      %v389 = vunpack.c.l.b16 %v271
      %v390 = vunpack.c.l.b16 %v272
      %v391 = vunpack.c.h.b16 %v272
      %v392 = vunpack.c.l.b16 %v273
      %v393 = vunpack.c.l.b16 %v274
      %v394 = vunpack.c.h.b16 %v274
      %v395 = vunpack.c.l.b16 %v275
      %v396 = vunpack.c.l.b16 %v276
      %v397 = vunpack.c.h.b16 %v276
      %v398 = vunpack.c.l.b16 %v277
      %v399 = vunpack.c.l.b16 %v278
      %v400 = vunpack.c.h.b16 %v278
      %v401 = vunpack.c.l.b16 %v279
      %v402 = vunpack.c.l.b16 %v280
      %v403 = vunpack.c.h.b16 %v280
      %v404 = vunpack.c.l.b16 %v281
      %v405 = vunpack.c.l.b16 %v282
      %v406 = vunpack.c.h.b16 %v282
      %v407 = vunpack.c.l.b16 %v283
      %v408 = vpack.c.b16 %v387, %v384
      %v409 = vpack.c.b16 %v388, %v385
      %v410 = vpack.c.b16 %v389, %v386
      %v411 = vpack.c.b16 %v393, %v390
      %v412 = vpack.c.b16 %v394, %v391
      %v413 = vpack.c.b16 %v395, %v392
      %v414 = vpack.c.b16 %v399, %v396
      %v415 = vpack.c.b16 %v400, %v397
      %v416 = vpack.c.b16 %v401, %v398
      %v417 = vpack.c.b16 %v405, %v402
      %v418 = vpack.c.b16 %v406, %v403
      %v419 = vpack.c.b16 %v407, %v404
      %v464 = vunpack.c.l.b16 %v284
      %v465 = vunpack.c.l.b16 %v285
      %v466 = vunpack.c.l.b16 %v286
      %v467 = vunpack.c.l.b16 %v287
      %v468 = vunpack.c.l.b16 %v288
      %v469 = vunpack.c.l.b16 %v289
      %v470 = vunpack.c.l.b16 %v290
      %v471 = vunpack.c.l.b16 %v291
      %v472 = vunpack.c.l.b16 %v292
      %v473 = vunpack.c.l.b16 %v293
      %v474 = vunpack.c.l.b16 %v294
      %v475 = vunpack.c.l.b16 %v295
      %v476 = vunpack.c.l.b16 %v296
      %v477 = vunpack.c.l.b16 %v297
      %v478 = vunpack.c.l.b16 %v298
      %v479 = vunpack.c.l.b16 %v299
      %v480 = vunpack.c.l.b16 %v300
      %v481 = vunpack.c.l.b16 %v301
      %v482 = vunpack.c.l.b16 %v302
      %v483 = vunpack.c.l.b16 %v303
      %v484 = vunpack.c.l.b16 %v304
      %v485 = vunpack.c.l.b16 %v305
      %v486 = vunpack.c.l.b16 %v306
      %v487 = vunpack.c.l.b16 %v307
      %v488 = vunpack.c.l.b16 %v308
      %v489 = vunpack.c.l.b16 %v309
      %v490 = vunpack.c.l.b16 %v310
      %v491 = vunpack.c.l.b16 %v311
      %v492 = vunpack.c.l.b16 %v312
      %v493 = vunpack.c.l.b16 %v313
      %v494 = vunpack.c.l.b16 %v314
      %v495 = vunpack.c.l.b16 %v315
      %v496 = vunpack.c.l.b16 %v316
      %v497 = vunpack.c.l.b16 %v317
      %v498 = vunpack.c.l.b16 %v318
      %v499 = vunpack.c.l.b16 %v319
      %v500 = vpack.c.b16 %v465, %v464
      %v501 = vpack.c.b16 %v467, %v466
      %v502 = vpack.c.b16 %v469, %v468
      %v503 = vpack.c.b16 %v471, %v470
      %v504 = vpack.c.b16 %v473, %v472
      %v505 = vpack.c.b16 %v475, %v474
      %v506 = vpack.c.b16 %v477, %v476
      %v507 = vpack.c.b16 %v479, %v478
      %v508 = vpack.c.b16 %v481, %v480
      %v509 = vpack.c.b16 %v483, %v482
      %v510 = vpack.c.b16 %v485, %v484
      %v511 = vpack.c.b16 %v487, %v486
      %v512 = vpack.c.b16 %v489, %v488
      %v513 = vpack.c.b16 %v491, %v490
      %v514 = vpack.c.b16 %v493, %v492
      %v515 = vpack.c.b16 %v495, %v494
      %v516 = vpack.c.b16 %v497, %v496
      %v517 = vpack.c.b16 %v499, %v498
      %vm536 = vcmask 261120
      %v538 = vsel %vm536, %v410, 0
      %v541 = vsel %vm536, %v413, 0
      %v544 = vsel %vm536, %v416, 0
      %v547 = vsel %vm536, %v419, 0
      %549 = vmatprep.subr.bf16.mxu0 0
      %550 = vmatpush1.bf16.msra.mxu0 %v500
      %551 = vmatprep.subr.bf16.mxu0 0
      %552 = vmatpush1.bf16.msra.mxu0 %v501
      %553 = vmatprep.subr.bf16.mxu0 0
      %554 = vmatpush1.bf16.msra.mxu0 %v502
      %555 = vmatprep.subr.bf16.mxu0 0
      %556 = vmatpush1.bf16.msra.mxu0 %v503
      %557 = vmatprep.subr.bf16.mxu0 0
      %558 = vmatpush1.bf16.msra.mxu0 %v504
      %559 = vmatprep.subr.bf16.mxu0 0
      %560 = vmatpush1.bf16.msra.mxu0 %v505
      %561 = vmatprep.subr.bf16.mxu0 0
      %562 = vmatpush1.bf16.msra.mxu0 %v506
      %563 = vmatprep.subr.bf16.mxu0 0
      %564 = vmatpush1.bf16.msra.mxu0 %v507
      %565 = vmatprep.subr.bf16.mxu0 0
      %566 = vmatpush1.bf16.msra.mxu0 %v508
      %567 = vmatprep.subr.bf16.mxu0 0
      %568 = vmatpush1.bf16.msra.mxu0 %v509
      %569 = vmatprep.subr.bf16.mxu0 0
      %570 = vmatpush1.bf16.msra.mxu0 %v510
      %571 = vmatprep.subr.bf16.mxu0 0
      %572 = vmatpush1.bf16.msra.mxu0 %v511
      %573 = vmatprep.subr.bf16.mxu0 0
      %574 = vmatpush1.bf16.msra.mxu0 %v512
      %575 = vmatprep.subr.bf16.mxu0 0
      %576 = vmatpush1.bf16.msra.mxu0 %v513
      %577 = vmatprep.subr.bf16.mxu0 0
      %578 = vmatpush1.bf16.msra.mxu0 %v514
      %579 = vmatprep.subr.bf16.mxu0 0
      %580 = vmatpush1.bf16.msra.mxu0 %v515
      %581 = vmatprep.mubr.bf16.mxu0 %v409
      %582 = vmatmul.mubr.bf16.gmra.mrb[0].mxu0 %v408
      %v583 = vpop.f32.mrb[0].mxu0
      %v584 = vadd.f32 %v331, %v583
      %v585 = vpop.f32.mrb[0].mxu0
      %v586 = vpop.f32.mrb[0].mxu0
      %v587 = vadd.f32 %v336, %v586
      %v588 = vpop.f32.mrb[0].mxu0
      %589 = vmatprep.mubr.bf16.mxu0 %v412
      %590 = vmatmul.mubr.bf16.gmra.mrb[0].mxu0 %v411
      %v591 = vpop.f32.mrb[0].mxu0
      %v592 = vadd.f32 %v341, %v591
      %v593 = vpop.f32.mrb[0].mxu0
      %v594 = vpop.f32.mrb[0].mxu0
      %v595 = vadd.f32 %v346, %v594
      %v596 = vpop.f32.mrb[0].mxu0
      %597 = vmatprep.mubr.bf16.mxu0 %v415
      %598 = vmatmul.mubr.bf16.gmra.mrb[0].mxu0 %v414
      %v599 = vpop.f32.mrb[0].mxu0
      %v600 = vadd.f32 %v351, %v599
      %v601 = vpop.f32.mrb[0].mxu0
      %v602 = vpop.f32.mrb[0].mxu0
      %v603 = vadd.f32 %v356, %v602
      %v604 = vpop.f32.mrb[0].mxu0
      %605 = vmatprep.mubr.bf16.mxu0 %v418
      %606 = vmatmul.mubr.bf16.gmra.mrb[0].mxu0 %v417
      %v607 = vpop.f32.mrb[0].mxu0
      %v608 = vadd.f32 %v361, %v607
      %v609 = vpop.f32.mrb[0].mxu0
      %v610 = vpop.f32.mrb[0].mxu0
      %v611 = vadd.f32 %v366, %v610
      %v612 = vpop.f32.mrb[0].mxu0
      %613 = vdwg.mxu0
      %614 = vmatprep.subr.bf16.mxu0 0
      %615 = vmatpush1.bf16.msra.mxu0 %v516
      %616 = vmatprep.subr.bf16.mxu0 0
      %617 = vmatpush1.bf16.msra.mxu0 %v517
      %618 = vmatprep.subr.bf16.mxu0 0
      %619 = vmatpush1.bf16.msra.mxu0 0
      %620 = vmatprep.subr.bf16.mxu0 0
      %621 = vmatpush1.bf16.msra.mxu0 0
      %622 = vmatprep.subr.bf16.mxu0 0
      %623 = vmatpush1.bf16.msra.mxu0 0
      %624 = vmatprep.subr.bf16.mxu0 0
      %625 = vmatpush1.bf16.msra.mxu0 0
      %626 = vmatprep.subr.bf16.mxu0 0
      %627 = vmatpush1.bf16.msra.mxu0 0
      %628 = vmatprep.subr.bf16.mxu0 0
      %629 = vmatpush1.bf16.msra.mxu0 0
      %630 = vmatprep.subr.bf16.mxu0 0
      %631 = vmatpush1.bf16.msra.mxu0 0
      %632 = vmatprep.subr.bf16.mxu0 0
      %633 = vmatpush1.bf16.msra.mxu0 0
      %634 = vmatprep.subr.bf16.mxu0 0
      %635 = vmatpush1.bf16.msra.mxu0 0
      %636 = vmatprep.subr.bf16.mxu0 0
      %637 = vmatpush1.bf16.msra.mxu0 0
      %638 = vmatprep.subr.bf16.mxu0 0
      %639 = vmatpush1.bf16.msra.mxu0 0
      %640 = vmatprep.subr.bf16.mxu0 0
      %641 = vmatpush1.bf16.msra.mxu0 0
      %642 = vmatprep.subr.bf16.mxu0 0
      %643 = vmatpush1.bf16.msra.mxu0 0
      %644 = vmatprep.subr.bf16.mxu0 0
      %645 = vmatpush1.bf16.msra.mxu0 0
      %646 = vmatprep.mubr.bf16.mxu0 0
      %647 = vmatmul.mubr.bf16.gmra.mrb[0].mxu0 %v538
      %v648 = vpop.f32.mrb[0].mxu0
      %v649 = vadd.f32 %v584, %v648
      %v650 = vpop.f32.mrb[0].mxu0
      %v651 = vpop.f32.mrb[0].mxu0
      %v652 = vadd.f32 %v587, %v651
      %v653 = vpop.f32.mrb[0].mxu0
      %654 = vmatprep.mubr.bf16.mxu0 0
      %655 = vmatmul.mubr.bf16.gmra.mrb[0].mxu0 %v541
      %v656 = vpop.f32.mrb[0].mxu0
      %v657 = vadd.f32 %v592, %v656
      %v658 = vpop.f32.mrb[0].mxu0
      %v659 = vpop.f32.mrb[0].mxu0
      %v660 = vadd.f32 %v595, %v659
      %v661 = vpop.f32.mrb[0].mxu0
      %662 = vmatprep.mubr.bf16.mxu0 0
      %663 = vmatmul.mubr.bf16.gmra.mrb[0].mxu0 %v544
      %v664 = vpop.f32.mrb[0].mxu0
      %v665 = vadd.f32 %v600, %v664
      %v666 = vpop.f32.mrb[0].mxu0
      %v667 = vpop.f32.mrb[0].mxu0
      %v668 = vadd.f32 %v603, %v667
      %v669 = vpop.f32.mrb[0].mxu0
      %670 = vmatprep.mubr.bf16.mxu0 0
      %671 = vmatmul.mubr.bf16.gmra.mrb[0].mxu0 %v547
      %v672 = vpop.f32.mrb[0].mxu0
      %v673 = vadd.f32 %v608, %v672
      %v674 = vpop.f32.mrb[0].mxu0
      %v675 = vpop.f32.mrb[0].mxu0
      %v676 = vadd.f32 %v611, %v675
      %v677 = vpop.f32.mrb[0].mxu0
      %678 = vdwg.mxu0
      %v679 = vpack.c.bf16 %v652, %v649
      %v680 = vpack.c.bf16 %v660, %v657
      %v681 = vpack.c.bf16 %v668, %v665
      %v682 = vpack.c.bf16 %v676, %v673
      %v687 = vunpack.c.l.b16 %v679
      %v688 = vunpack.c.h.b16 %v679
      %v689 = vunpack.c.l.b16 %v680
      %v690 = vunpack.c.h.b16 %v680
      %v691 = vunpack.c.l.b16 %v681
      %v692 = vunpack.c.h.b16 %v681
      %v693 = vunpack.c.l.b16 %v682
      %v694 = vunpack.c.h.b16 %v682
      %v695 = vpack.c.b16 %v687, %v687
      %v696 = vpack.c.b16 %v688, %v688
      %v697 = vpack.c.b16 %v689, %v689
      %v698 = vpack.c.b16 %v690, %v690
      %v699 = vpack.c.b16 %v691, %v691
      %v700 = vpack.c.b16 %v692, %v692
      %v701 = vpack.c.b16 %v693, %v693
      %v702 = vpack.c.b16 %v694, %v694
      %711 = vst [vmem:[%s265] sm:$0xf] %v695
      %712 = vst [vmem:[%s265 + $0x4] sm:$0xf] %v696
      %713 = vst [vmem:[%s265 + $0x8] sm:$0xf] %v697
      %714 = vst [vmem:[%s265 + $0xc] sm:$0xf] %v698
      %715 = vst [vmem:[%s265 + $0x10] sm:$0xf] %v699
      %716 = vst [vmem:[%s265 + $0x14] sm:$0xf] %v700
      %717 = vst [vmem:[%s265 + $0x18] sm:$0xf] %v701
      %718 = vst [vmem:[%s265 + $0x1c] sm:$0xf] %v702
      %s719 = smul.u32 8, %s20
      %p720 = scmp.lt.s32.totalorder %s19, 1
      %s721 = scalar_select %p720, %s19, 1
      %p722 = scmp.lt.s32.totalorder %s719, 7
      %s723 = scalar_select %p722, %s719, 7
      %p724 = scmp.lt.s32.totalorder %s21, 0
      %s725 = scalar_select %p724, %s21, 0
      %s726 = sadd.s32 %s725, %s723
      %s727 = smul.addr %s721, 8
      %s728 = sadd.s32 %s726, %s727
      %s729 = smul.addr %s728, 4
      %s730 = scalar_lea.vmem %s3, %s729
      // Predicated region
      $region33: #{upchannel_ban_forward.5} parent=31 // pred_check
        %p731 = pneg %p135
      $region34: #{upchannel_ban_forward.5} parent=31 // pred_check_branch
        %733 = sbr.rel (%p731) target = $region36
      $region35: #{upchannel_ban_forward.5} parent=31 // pred_region
        %s734 = smul.u32 8, %s20
      $region36: #{upchannel_ban_forward.5} parent=31 // pred_fallthru
        _
    $region32: #{upchannel_ban_forward.5} parent=5 // pred_fallthru
      _
    %p735 = scmp.le.s32.totalorder 2, %s9
    // Predicated region
    $region37: #{upchannel_ban_forward.5} parent=5 // pred_check
      %p736 = pneg %p735
    $region38: #{upchannel_ban_forward.5} parent=5 // pred_check_branch
      %738 = sbr.rel (%p736) target = $region40
    $region39: #{upchannel_ban_forward.5} parent=5 // pred_region
      %s739 = ssub.s32 %s9, 2
      // Predicated region
      $region41: #{upchannel_ban_forward.5} parent=39 // pred_check
        %p740 = pneg %p141
      $region42: #{upchannel_ban_forward.5} parent=39 // pred_check_branch
        %742 = sbr.rel (%p740) target = $region44
      $region43: #{upchannel_ban_forward.5} parent=39 // pred_region
        %s743 = smul.u32 8, %s23
        %p744 = scmp.lt.s32.totalorder %s22, 1
        %s745 = scalar_select %p744, %s22, 1
        %p746 = scmp.lt.s32.totalorder %s743, 7
        %s747 = scalar_select %p746, %s743, 7
        %p748 = scmp.lt.s32.totalorder %s24, 0
        %s749 = scalar_select %p748, %s24, 0
        %s750 = sadd.s32 %s749, %s747
        %s751 = smul.addr %s745, 8
        %s752 = sadd.s32 %s750, %s751
        %s753 = smul.addr %s752, 4
        %s754 = scalar_lea.vmem %s3, %s753
      $region44: #{upchannel_ban_forward.5} parent=39 // pred_fallthru
        _
    $region40: #{upchannel_ban_forward.5} parent=5 // pred_fallthru
      _
  $region6: #{upchannel_ban_forward.5} parent=0 // loop_footer
    %s13 = sadd.s32 1, %s9
  $region7: #{upchannel_ban_forward.5} parent=0 // loop_footer_branch
    %8 = sbr.rel target = $region3
  $region8: #{upchannel_ban_forward.5} parent=0 // loop_exit
    _

// kernel: upchannel_ban_forward.4
$region0: #{upchannel_ban_forward.4}
  #allocation0 [shape = 'u32[]', space=smem, size = 0x4, offset = 0x4, fixed_abs, tag = 'smem constant byte address 0x4 - core index']
  #allocation1 [shape = 'u32[144,128]{1,0:T(1,128)}', space=vmem, size = 0x12000, scoped, tag = 'internal scratch']
  %s0 = inlined_call_operand.vmem [shape: bf16[2,288,128], index: 0, kind: input, shape index: {}]
  %s1 = inlined_call_operand.vmem [shape: bf16[192,288], index: 1, kind: input, shape index: {}]
  %s2 = inlined_call_operand.vmem [shape: f32[192,1], index: 2, kind: input, shape index: {}]
  %s3 = inlined_call_operand.vmem [shape: bf16[2,192,128], index: 3, kind: output, shape index: {}]
  %s4 = sld [smem:[#allocation0]]
  $region45: #{upchannel_ban_forward.4} parent=0
    _
  %s6 = ssub.s32 1, %s4
  %s7 = scalar_select 0, %s6, %s4
  loop: start=0, step=1, limit=4
  $region2: #{upchannel_ban_forward.4} parent=0 // loop_pre_header
    _
  $region3: #{upchannel_ban_forward.4} parent=0 // loop_header
    %s9 = sphi 0, %s13
    %p10 = scmp.ge.s32.totalorder %s9, 4
    %s16 = sphi 0, %s35
    %s17 = sphi 0, %s31
    %s18 = sphi 0, %s27
    %s19 = sphi 0, %s16
    %s20 = sphi 0, %s17
    %s21 = sphi 0, %s18
    %s22 = sphi 0, %s19
    %s23 = sphi 0, %s20
    %s24 = sphi 0, %s21
    %s40 = sphi 0, %s42
    %s43 = sphi 0, %s40
    %s44 = sphi 0, %s43
    %s60 = sphi 0, %s44
    %s66 = sphi 0, %s68
    %s69 = sphi 0, %s66
    %s70 = sphi 0, %s69
    %s86 = sphi 0, %s70
    %s92 = sphi 0, %s94
    %s95 = sphi 0, %s92
    %s96 = sphi 0, %s95
    %s112 = sphi 0, %s96
    %s122 = sphi 0, %s124
    %s125 = sphi 0, %s122
    %s126 = sphi 0, %s125
    %s142 = sphi 0, %s126
  $region4: #{upchannel_ban_forward.4} parent=0 // loop_header_branch
    %12 = sbr.rel (%p10) target = $region8
  $region5: #{upchannel_ban_forward.4} parent=0 // loop_body
    %s14 = ssub.s32 %s9, 1
    %s15 = ssub.s32 %s9, 2
    %s25 = sadd.s32 1, %s18
    %p26 = scmp.ge.s32.totalorder %s25, 1
    %s27 = scalar_select %p26, 0, %s25
    %s28 = sadd.s32 1, %s17
    %s29 = scalar_select %p26, %s28, %s17
    %p30 = scmp.ge.s32.totalorder %s29, 1
    %s31 = scalar_select %p30, 0, %s29
    %s32 = sadd.s32 1, %s16
    %s33 = scalar_select %p30, %s32, %s16
    %p34 = scmp.ge.s32.totalorder %s33, 2
    %s35 = scalar_select %p34, 0, %s33
    %s36 = ssub.s32 %s16, %s35
    %s37 = ssub.s32 %s18, %s27
    %s38 = sor.u32 %s36, %s37
    %p39 = scmp.eq.s32.totalorder %s38, 0
    %s41 = sadd.s32 %s40, 1
    %s42 = scalar_select %p39, %s40, %s41
    %p45 = pneg %p39
    %p46 = scmp.eq.s32.totalorder %s9, 1
    %p47 = por %p45, %p46
    %p48 = scmp.ne.s32.totalorder %s40, %s43
    %p49 = scmp.eq.s32.totalorder %s9, 0
    %p50 = por %p48, %p49
    %p51 = scmp.ne.s32.totalorder %s40, %s43
    %p52 = scmp.eq.s32.totalorder %s14, 1
    %p53 = por %p51, %p52
    %p54 = scmp.ne.s32.totalorder %s43, %s44
    %p55 = scmp.eq.s32.totalorder %s14, 0
    %p56 = por %p54, %p55
    %p57 = scmp.ne.s32.totalorder %s43, %s44
    %p58 = scmp.eq.s32.totalorder %s15, 1
    %p59 = por %p57, %p58
    %p61 = scmp.ne.s32.totalorder %s44, %s60
    %p62 = scmp.eq.s32.totalorder %s15, 0
    %p63 = por %p61, %p62
    %s64 = ssub.s32 %s17, %s31
    %p65 = scmp.eq.s32.totalorder %s64, 0
    %s67 = sadd.s32 %s66, 1
    %s68 = scalar_select %p65, %s66, %s67
    %p71 = pneg %p65
    %p72 = scmp.eq.s32.totalorder %s9, 1
    %p73 = por %p71, %p72
    %p74 = scmp.ne.s32.totalorder %s66, %s69
    %p75 = scmp.eq.s32.totalorder %s9, 0
    %p76 = por %p74, %p75
    %p77 = scmp.ne.s32.totalorder %s66, %s69
    %p78 = scmp.eq.s32.totalorder %s14, 1
    %p79 = por %p77, %p78
    %p80 = scmp.ne.s32.totalorder %s69, %s70
    %p81 = scmp.eq.s32.totalorder %s14, 0
    %p82 = por %p80, %p81
    %p83 = scmp.ne.s32.totalorder %s69, %s70
    %p84 = scmp.eq.s32.totalorder %s15, 1
    %p85 = por %p83, %p84
    %p87 = scmp.ne.s32.totalorder %s70, %s86
    %p88 = scmp.eq.s32.totalorder %s15, 0
    %p89 = por %p87, %p88
    %s90 = ssub.s32 %s17, %s31
    %p91 = scmp.eq.s32.totalorder %s90, 0
    %s93 = sadd.s32 %s92, 1
    %s94 = scalar_select %p91, %s92, %s93
    %p97 = pneg %p91
    %p98 = scmp.eq.s32.totalorder %s9, 1
    %p99 = por %p97, %p98
    %p100 = scmp.ne.s32.totalorder %s92, %s95
    %p101 = scmp.eq.s32.totalorder %s9, 0
    %p102 = por %p100, %p101
    %p103 = scmp.ne.s32.totalorder %s92, %s95
    %p104 = scmp.eq.s32.totalorder %s14, 1
    %p105 = por %p103, %p104
    %p106 = scmp.ne.s32.totalorder %s95, %s96
    %p107 = scmp.eq.s32.totalorder %s14, 0
    %p108 = por %p106, %p107
    %p109 = scmp.ne.s32.totalorder %s95, %s96
    %p110 = scmp.eq.s32.totalorder %s15, 1
    %p111 = por %p109, %p110
    %p113 = scmp.ne.s32.totalorder %s96, %s112
    %p114 = scmp.eq.s32.totalorder %s15, 0
    %p115 = por %p113, %p114
    %s116 = ssub.s32 %s16, %s35
    %s117 = ssub.s32 %s17, %s31
    %s118 = sor.u32 %s116, %s117
    %s119 = ssub.s32 %s18, %s27
    %s120 = sor.u32 %s118, %s119
    %p121 = scmp.eq.s32.totalorder %s120, 0
    %s123 = sadd.s32 %s122, 1
    %s124 = scalar_select %p121, %s122, %s123
    %p127 = pneg %p121
    %p128 = scmp.eq.s32.totalorder %s9, 1
    %p129 = por %p127, %p128
    %p130 = scmp.ne.s32.totalorder %s122, %s125
    %p131 = scmp.eq.s32.totalorder %s9, 0
    %p132 = por %p130, %p131
    %p133 = scmp.ne.s32.totalorder %s122, %s125
    %p134 = scmp.eq.s32.totalorder %s14, 1
    %p135 = por %p133, %p134
    %p136 = scmp.ne.s32.totalorder %s125, %s126
    %p137 = scmp.eq.s32.totalorder %s14, 0
    %p138 = por %p136, %p137
    %p139 = scmp.ne.s32.totalorder %s125, %s126
    %p140 = scmp.eq.s32.totalorder %s15, 1
    %p141 = por %p139, %p140
    %p143 = scmp.ne.s32.totalorder %s126, %s142
    %p144 = scmp.eq.s32.totalorder %s15, 0
    %p145 = por %p143, %p144
    %p146 = scmp.le.s32.totalorder 1, %s9
    %p147 = scmp.lt.s32.totalorder %s9, 3
    %p148 = pnand %p146, %p147
    %p149 = pneg %p148
    // Predicated region
    $region9: #{upchannel_ban_forward.4} parent=5 // pred_check
      _
    $region10: #{upchannel_ban_forward.4} parent=5 // pred_check_branch
      %151 = sbr.rel (%p148) target = $region12
    $region11: #{upchannel_ban_forward.4} parent=5 // pred_region
      %s152 = ssub.s32 %s9, 1
      // Predicated region
      $region13: #{upchannel_ban_forward.4} parent=11 // pred_check
        %p153 = pneg %p82
      $region14: #{upchannel_ban_forward.4} parent=11 // pred_check_branch
        %155 = sbr.rel (%p153) target = $region16
      $region15: #{upchannel_ban_forward.4} parent=11 // pred_region
        %s156 = smul.u32 24, %s20
        %p157 = scmp.lt.s32.totalorder %s156, 23
        %s158 = scalar_select %p157, %s156, 23
        %s159 = smul.addr %s158, 3
        %s160 = smul.addr %s159, 4
        %s161 = scalar_lea.vmem %s1, %s160
        %s162 = smul.u32 24, %s20
      $region16: #{upchannel_ban_forward.4} parent=11 // pred_fallthru
        _
      // Predicated region
      $region17: #{upchannel_ban_forward.4} parent=11 // pred_check
        %p163 = pneg %p108
      $region18: #{upchannel_ban_forward.4} parent=11 // pred_check_branch
        %165 = sbr.rel (%p163) target = $region20
      $region19: #{upchannel_ban_forward.4} parent=11 // pred_region
        %s166 = smul.u32 24, %s20
        %p167 = scmp.lt.s32.totalorder %s166, 23
        %s168 = scalar_select %p167, %s166, 23
        %s169 = smul.addr %s168, 8
        %s170 = scalar_lea.vmem %s2, %s169
        %s171 = smul.u32 24, %s20
      $region20: #{upchannel_ban_forward.4} parent=11 // pred_fallthru
        _
    $region12: #{upchannel_ban_forward.4} parent=5 // pred_fallthru
      _
    %p172 = scmp.lt.s32.totalorder %s9, 2
    // Predicated region
    $region21: #{upchannel_ban_forward.4} parent=5 // pred_check
      %p173 = pneg %p172
    $region22: #{upchannel_ban_forward.4} parent=5 // pred_check_branch
      %175 = sbr.rel (%p173) target = $region24
    $region23: #{upchannel_ban_forward.4} parent=5 // pred_region
      // Predicated region
      $region25: #{upchannel_ban_forward.4} parent=23 // pred_check
        %p176 = pneg %p50
      $region26: #{upchannel_ban_forward.4} parent=23 // pred_check_branch
        %178 = sbr.rel (%p176) target = $region28
      $region27: #{upchannel_ban_forward.4} parent=23 // pred_region
        %p179 = scmp.lt.s32.totalorder %s16, 1
        %s180 = scalar_select %p179, %s16, 1
        %p181 = scmp.lt.s32.totalorder %s18, 0
        %s182 = scalar_select %p181, %s18, 0
        %s183 = smul.addr %s180, 36
        %s184 = sadd.s32 %s182, %s183
        %s185 = smul.addr %s184, 4
        %s186 = scalar_lea.vmem %s0, %s185
      $region28: #{upchannel_ban_forward.4} parent=23 // pred_fallthru
        _
    $region24: #{upchannel_ban_forward.4} parent=5 // pred_fallthru
      _
    %p187 = scmp.le.s32.totalorder 1, %s9
    %p188 = scmp.lt.s32.totalorder %s9, 3
    %p189 = pnand %p187, %p188
    %p190 = pneg %p189
    // Predicated region
    $region29: #{upchannel_ban_forward.4} parent=5 // pred_check
      _
    $region30: #{upchannel_ban_forward.4} parent=5 // pred_check_branch
      %192 = sbr.rel (%p189) target = $region32
    $region31: #{upchannel_ban_forward.4} parent=5 // pred_region
      %s193 = ssub.s32 %s9, 1
      %p194 = scmp.lt.s32.totalorder %s19, 1
      %s195 = scalar_select %p194, %s19, 1
      %p196 = scmp.lt.s32.totalorder %s21, 0
      %s197 = scalar_select %p196, %s21, 0
      %s198 = smul.addr %s195, 36
      %s199 = sadd.s32 %s197, %s198
      %s200 = smul.addr %s199, 4
      %s201 = scalar_lea.vmem %s0, %s200
      %p202 = pneg %p56
      %p203 = pneg %p53
      %s204 = smul.u32 24, %s20
      %p205 = scmp.lt.s32.totalorder %s204, 23
      %s206 = scalar_select %p205, %s204, 23
      %s207 = smul.addr %s206, 3
      %s208 = smul.addr %s207, 4
      %s209 = scalar_lea.vmem %s1, %s208
      %p210 = pneg %p82
      %p211 = pneg %p79
      %s212 = smul.u32 24, %s20
      %p213 = scmp.lt.s32.totalorder %s212, 23
      %s214 = scalar_select %p213, %s212, 23
      %s215 = smul.addr %s214, 8
      %s216 = scalar_lea.vmem %s2, %s215
      %p217 = pneg %p108
      %p218 = pneg %p105
      %p219 = pneg %p138
      %p220 = pneg %p135
      %s221 = smul.u32 24, %s20
      %p222 = scmp.lt.s32.totalorder %s19, 1
      %s223 = scalar_select %p222, %s19, 1
      %p224 = scmp.lt.s32.totalorder %s221, 23
      %s225 = scalar_select %p224, %s221, 23
      %p226 = scmp.lt.s32.totalorder %s21, 0
      %s227 = scalar_select %p226, %s21, 0
      %s228 = sadd.s32 %s227, %s225
      %s229 = smul.addr %s223, 24
      %s230 = sadd.s32 %s228, %s229
      %s231 = smul.addr %s230, 4
      %s232 = scalar_lea.vmem %s3, %s231
      %p233 = scmp.lt.s32.totalorder %s19, 1
      %s234 = scalar_select %p233, %s19, 1
      %p235 = scmp.lt.s32.totalorder %s21, 0
      %s236 = scalar_select %p235, %s21, 0
      %s237 = smul.addr %s234, 36
      %s238 = sadd.s32 %s236, %s237
      %s239 = smul.addr %s238, 4
      %s240 = scalar_lea.vmem %s0, %s239
      %s241 = smul.u32 24, %s20
      %p242 = scmp.lt.s32.totalorder %s241, 23
      %s243 = scalar_select %p242, %s241, 23
      %s244 = smul.addr %s243, 3
      %s245 = smul.addr %s244, 4
      %s246 = scalar_lea.vmem %s1, %s245
      %s247 = smul.u32 24, %s20
      %s248 = smul.u32 24, %s20
      %p249 = scmp.lt.s32.totalorder %s248, 23
      %s250 = scalar_select %p249, %s248, 23
      %s251 = smul.addr %s250, 8
      %s252 = scalar_lea.vmem %s2, %s251
      %s253 = smul.u32 24, %s20
      %s254 = smul.u32 24, %s20
      %p255 = scmp.lt.s32.totalorder %s19, 1
      %s256 = scalar_select %p255, %s19, 1
      %p257 = scmp.lt.s32.totalorder %s254, 23
      %s258 = scalar_select %p257, %s254, 23
      %p259 = scmp.lt.s32.totalorder %s21, 0
      %s260 = scalar_select %p259, %s21, 0
      %s261 = sadd.s32 %s260, %s258
      %s262 = smul.addr %s256, 24
      %s263 = sadd.s32 %s261, %s262
      %s264 = smul.addr %s263, 4
      %s265 = scalar_lea.vmem %s3, %s264
      %s266 = smul.u32 24, %s20
      %v268 = vld [vmem:[%s246] sm:$0xff]
      %v269 = vld [vmem:[%s246 + $0x8] sm:$0xf]
      %v270 = vld [vmem:[%s246 + $0xc] sm:$0xff]
      %v271 = vld [vmem:[%s246 + $0x14] sm:$0xf]
      %v272 = vld [vmem:[%s246 + $0x18] sm:$0xff]
      %v273 = vld [vmem:[%s246 + $0x20] sm:$0xf]
      %v274 = vld [vmem:[%s246 + $0x24] sm:$0xff]
      %v275 = vld [vmem:[%s246 + $0x2c] sm:$0xf]
      %v276 = vld [vmem:[%s246 + $0x30] sm:$0xff]
      %v277 = vld [vmem:[%s246 + $0x38] sm:$0xf]
      %v278 = vld [vmem:[%s246 + $0x3c] sm:$0xff]
      %v279 = vld [vmem:[%s246 + $0x44] sm:$0xf]
      %v280 = vld [vmem:[%s246 + $0x48] sm:$0xff]
      %v281 = vld [vmem:[%s246 + $0x50] sm:$0xf]
      %v282 = vld [vmem:[%s246 + $0x54] sm:$0xff]
      %v283 = vld [vmem:[%s246 + $0x5c] sm:$0xf]
      %v284 = vld [vmem:[%s246 + $0x60] sm:$0xff]
      %v285 = vld [vmem:[%s246 + $0x68] sm:$0xf]
      %v286 = vld [vmem:[%s246 + $0x6c] sm:$0xff]
      %v287 = vld [vmem:[%s246 + $0x74] sm:$0xf]
      %v288 = vld [vmem:[%s246 + $0x78] sm:$0xff]
      %v289 = vld [vmem:[%s246 + $0x80] sm:$0xf]
      %v290 = vld [vmem:[%s246 + $0x84] sm:$0xff]
      %v291 = vld [vmem:[%s246 + $0x8c] sm:$0xf]
      %v292 = vld [vmem:[%s246 + $0x90] sm:$0xff]
      %v293 = vld [vmem:[%s246 + $0x98] sm:$0xf]
      %v294 = vld [vmem:[%s246 + $0x9c] sm:$0xff]
      %v295 = vld [vmem:[%s246 + $0xa4] sm:$0xf]
      %v296 = vld [vmem:[%s246 + $0xa8] sm:$0xff]
      %v297 = vld [vmem:[%s246 + $0xb0] sm:$0xf]
      %v298 = vld [vmem:[%s246 + $0xb4] sm:$0xff]
      %v299 = vld [vmem:[%s246 + $0xbc] sm:$0xf]
      %v300 = vld [vmem:[%s246 + $0xc0] sm:$0xff]
      %v301 = vld [vmem:[%s246 + $0xc8] sm:$0xf]
      %v302 = vld [vmem:[%s246 + $0xcc] sm:$0xff]
      %v303 = vld [vmem:[%s246 + $0xd4] sm:$0xf]
      %v304 = vld [vmem:[%s246 + $0xd8] sm:$0xff]
      %v305 = vld [vmem:[%s246 + $0xe0] sm:$0xf]
      %v306 = vld [vmem:[%s246 + $0xe4] sm:$0xff]
      %v307 = vld [vmem:[%s246 + $0xec] sm:$0xf]
      %v308 = vld [vmem:[%s246 + $0xf0] sm:$0xff]
      %v309 = vld [vmem:[%s246 + $0xf8] sm:$0xf]
      %v310 = vld [vmem:[%s246 + $0xfc] sm:$0xff]
      %v311 = vld [vmem:[%s246 + $0x104] sm:$0xf]
      %v312 = vld [vmem:[%s246 + $0x108] sm:$0xff]
      %v313 = vld [vmem:[%s246 + $0x110] sm:$0xf]
      %v314 = vld [vmem:[%s246 + $0x114] sm:$0xff]
      %v315 = vld [vmem:[%s246 + $0x11c] sm:$0xf]
      %v316 = vld [vmem:[%s240] sm:$0xf]
      %v317 = vld [vmem:[%s240 + $0x4] sm:$0xf]
      %v318 = vld [vmem:[%s240 + $0x8] sm:$0xf]
      %v319 = vld [vmem:[%s240 + $0xc] sm:$0xf]
      %v320 = vld [vmem:[%s240 + $0x10] sm:$0xf]
      %v321 = vld [vmem:[%s240 + $0x14] sm:$0xf]
      %v322 = vld [vmem:[%s240 + $0x18] sm:$0xf]
      %v323 = vld [vmem:[%s240 + $0x1c] sm:$0xf]
      %v324 = vld [vmem:[%s240 + $0x20] sm:$0xf]
      %v325 = vld [vmem:[%s240 + $0x24] sm:$0xf]
      %v326 = vld [vmem:[%s240 + $0x28] sm:$0xf]
      %v327 = vld [vmem:[%s240 + $0x2c] sm:$0xf]
      %v328 = vld [vmem:[%s240 + $0x30] sm:$0xf]
      %v329 = vld [vmem:[%s240 + $0x34] sm:$0xf]
      %v330 = vld [vmem:[%s240 + $0x38] sm:$0xf]
      %v331 = vld [vmem:[%s240 + $0x3c] sm:$0xf]
      %v332 = vld [vmem:[%s240 + $0x40] sm:$0xf]
      %v333 = vld [vmem:[%s240 + $0x44] sm:$0xf]
      %v334 = vld [vmem:[%s240 + $0x48] sm:$0xf]
      %v335 = vld [vmem:[%s240 + $0x4c] sm:$0xf]
      %v336 = vld [vmem:[%s240 + $0x50] sm:$0xf]
      %v337 = vld [vmem:[%s240 + $0x54] sm:$0xf]
      %v338 = vld [vmem:[%s240 + $0x58] sm:$0xf]
      %v339 = vld [vmem:[%s240 + $0x5c] sm:$0xf]
      %v340 = vld [vmem:[%s240 + $0x60] sm:$0xf]
      %v341 = vld [vmem:[%s240 + $0x64] sm:$0xf]
      %v342 = vld [vmem:[%s240 + $0x68] sm:$0xf]
      %v343 = vld [vmem:[%s240 + $0x6c] sm:$0xf]
      %v344 = vld [vmem:[%s240 + $0x70] sm:$0xf]
      %v345 = vld [vmem:[%s240 + $0x74] sm:$0xf]
      %v346 = vld [vmem:[%s240 + $0x78] sm:$0xf]
      %v347 = vld [vmem:[%s240 + $0x7c] sm:$0xf]
      %v348 = vld [vmem:[%s240 + $0x80] sm:$0xf]
      %v349 = vld [vmem:[%s240 + $0x84] sm:$0xf]
      %v350 = vld [vmem:[%s240 + $0x88] sm:$0xf]
      %v351 = vld [vmem:[%s240 + $0x8c] sm:$0xf]
      %v352 = vld [vmem:[%s252] sm:$0xff]
      %v353 = vld [vmem:[%s252 + $0x8] sm:$0xff]
      %v354 = vld [vmem:[%s252 + $0x10] sm:$0xff]
      %v355 = vld [vmem:[%s252 + $0x18] sm:$0xff]
      %v356 = vld [vmem:[%s252 + $0x20] sm:$0xff]
      %v357 = vld [vmem:[%s252 + $0x28] sm:$0xff]
      %v358 = vld [vmem:[%s252 + $0x30] sm:$0xff]
      %v359 = vld [vmem:[%s252 + $0x38] sm:$0xff]
      %v360 = vld [vmem:[%s252 + $0x40] sm:$0xff]
      %v361 = vld [vmem:[%s252 + $0x48] sm:$0xff]
      %v362 = vld [vmem:[%s252 + $0x50] sm:$0xff]
      %v363 = vld [vmem:[%s252 + $0x58] sm:$0xff]
      %v364 = vld [vmem:[%s252 + $0x60] sm:$0xff]
      %v365 = vld [vmem:[%s252 + $0x68] sm:$0xff]
      %v366 = vld [vmem:[%s252 + $0x70] sm:$0xff]
      %v367 = vld [vmem:[%s252 + $0x78] sm:$0xff]
      %v368 = vld [vmem:[%s252 + $0x80] sm:$0xff]
      %v369 = vld [vmem:[%s252 + $0x88] sm:$0xff]
      %v370 = vld [vmem:[%s252 + $0x90] sm:$0xff]
      %v371 = vld [vmem:[%s252 + $0x98] sm:$0xff]
      %v372 = vld [vmem:[%s252 + $0xa0] sm:$0xff]
      %v373 = vld [vmem:[%s252 + $0xa8] sm:$0xff]
      %v374 = vld [vmem:[%s252 + $0xb0] sm:$0xff]
      %v375 = vld [vmem:[%s252 + $0xb8] sm:$0xff]
      %377 = vset.pattern.permute.xlu0 0
      %378 = vperm.xlu0 %377, %v352
      %v379 = vpop.permute.xlu0 %378
      %382 = vset.pattern.permute.xlu0 0
      %383 = vperm.xlu0 %382, %v353
      %v384 = vpop.permute.xlu0 %383
      %387 = vset.pattern.permute.xlu0 0
      %388 = vperm.xlu0 %387, %v354
      %v389 = vpop.permute.xlu0 %388
      %392 = vset.pattern.permute.xlu0 0
      %393 = vperm.xlu0 %392, %v355
      %v394 = vpop.permute.xlu0 %393
      %397 = vset.pattern.permute.xlu0 0
      %398 = vperm.xlu0 %397, %v356
      %v399 = vpop.permute.xlu0 %398
      %402 = vset.pattern.permute.xlu0 0
      %403 = vperm.xlu0 %402, %v357
      %v404 = vpop.permute.xlu0 %403
      %407 = vset.pattern.permute.xlu0 0
      %408 = vperm.xlu0 %407, %v358
      %v409 = vpop.permute.xlu0 %408
      %412 = vset.pattern.permute.xlu0 0
      %413 = vperm.xlu0 %412, %v359
      %v414 = vpop.permute.xlu0 %413
      %417 = vset.pattern.permute.xlu0 0
      %418 = vperm.xlu0 %417, %v360
      %v419 = vpop.permute.xlu0 %418
      %422 = vset.pattern.permute.xlu0 0
      %423 = vperm.xlu0 %422, %v361
      %v424 = vpop.permute.xlu0 %423
      %427 = vset.pattern.permute.xlu0 0
      %428 = vperm.xlu0 %427, %v362
      %v429 = vpop.permute.xlu0 %428
      %432 = vset.pattern.permute.xlu0 0
      %433 = vperm.xlu0 %432, %v363
      %v434 = vpop.permute.xlu0 %433
      %437 = vset.pattern.permute.xlu0 0
      %438 = vperm.xlu0 %437, %v364
      %v439 = vpop.permute.xlu0 %438
      %442 = vset.pattern.permute.xlu0 0
      %443 = vperm.xlu0 %442, %v365
      %v444 = vpop.permute.xlu0 %443
      %447 = vset.pattern.permute.xlu0 0
      %448 = vperm.xlu0 %447, %v366
      %v449 = vpop.permute.xlu0 %448
      %452 = vset.pattern.permute.xlu0 0
      %453 = vperm.xlu0 %452, %v367
      %v454 = vpop.permute.xlu0 %453
      %457 = vset.pattern.permute.xlu0 0
      %458 = vperm.xlu0 %457, %v368
      %v459 = vpop.permute.xlu0 %458
      %462 = vset.pattern.permute.xlu0 0
      %463 = vperm.xlu0 %462, %v369
      %v464 = vpop.permute.xlu0 %463
      %467 = vset.pattern.permute.xlu0 0
      %468 = vperm.xlu0 %467, %v370
      %v469 = vpop.permute.xlu0 %468
      %472 = vset.pattern.permute.xlu0 0
      %473 = vperm.xlu0 %472, %v371
      %v474 = vpop.permute.xlu0 %473
      %477 = vset.pattern.permute.xlu0 0
      %478 = vperm.xlu0 %477, %v372
      %v479 = vpop.permute.xlu0 %478
      %482 = vset.pattern.permute.xlu0 0
      %483 = vperm.xlu0 %482, %v373
      %v484 = vpop.permute.xlu0 %483
      %487 = vset.pattern.permute.xlu0 0
      %488 = vperm.xlu0 %487, %v374
      %v489 = vpop.permute.xlu0 %488
      %492 = vset.pattern.permute.xlu0 0
      %493 = vperm.xlu0 %492, %v375
      %v494 = vpop.permute.xlu0 %493
      %v544 = vunpack.c.l.b16 %v268
      %v545 = vunpack.c.h.b16 %v268
      %v546 = vunpack.c.l.b16 %v269
      %v547 = vunpack.c.l.b16 %v270
      %v548 = vunpack.c.h.b16 %v270
      %v549 = vunpack.c.l.b16 %v271
      %v550 = vunpack.c.l.b16 %v272
      %v551 = vunpack.c.h.b16 %v272
      %v552 = vunpack.c.l.b16 %v273
      %v553 = vunpack.c.l.b16 %v274
      %v554 = vunpack.c.h.b16 %v274
      %v555 = vunpack.c.l.b16 %v275
      %v556 = vunpack.c.l.b16 %v276
      %v557 = vunpack.c.h.b16 %v276
      %v558 = vunpack.c.l.b16 %v277
      %v559 = vunpack.c.l.b16 %v278
      %v560 = vunpack.c.h.b16 %v278
      %v561 = vunpack.c.l.b16 %v279
      %v562 = vunpack.c.l.b16 %v280
      %v563 = vunpack.c.h.b16 %v280
      %v564 = vunpack.c.l.b16 %v281
      %v565 = vunpack.c.l.b16 %v282
      %v566 = vunpack.c.h.b16 %v282
      %v567 = vunpack.c.l.b16 %v283
      %v568 = vunpack.c.l.b16 %v284
      %v569 = vunpack.c.h.b16 %v284
      %v570 = vunpack.c.l.b16 %v285
      %v571 = vunpack.c.l.b16 %v286
      %v572 = vunpack.c.h.b16 %v286
      %v573 = vunpack.c.l.b16 %v287
      %v574 = vunpack.c.l.b16 %v288
      %v575 = vunpack.c.h.b16 %v288
      %v576 = vunpack.c.l.b16 %v289
      %v577 = vunpack.c.l.b16 %v290
      %v578 = vunpack.c.h.b16 %v290
      %v579 = vunpack.c.l.b16 %v291
      %v580 = vunpack.c.l.b16 %v292
      %v581 = vunpack.c.h.b16 %v292
      %v582 = vunpack.c.l.b16 %v293
      %v583 = vunpack.c.l.b16 %v294
      %v584 = vunpack.c.h.b16 %v294
      %v585 = vunpack.c.l.b16 %v295
      %v586 = vunpack.c.l.b16 %v296
      %v587 = vunpack.c.h.b16 %v296
      %v588 = vunpack.c.l.b16 %v297
      %v589 = vunpack.c.l.b16 %v298
      %v590 = vunpack.c.h.b16 %v298
      %v591 = vunpack.c.l.b16 %v299
      %v592 = vunpack.c.l.b16 %v300
      %v593 = vunpack.c.h.b16 %v300
      %v594 = vunpack.c.l.b16 %v301
      %v595 = vunpack.c.l.b16 %v302
      %v596 = vunpack.c.h.b16 %v302
      %v597 = vunpack.c.l.b16 %v303
      %v598 = vunpack.c.l.b16 %v304
      %v599 = vunpack.c.h.b16 %v304
      %v600 = vunpack.c.l.b16 %v305
      %v601 = vunpack.c.l.b16 %v306
      %v602 = vunpack.c.h.b16 %v306
      %v603 = vunpack.c.l.b16 %v307
      %v604 = vunpack.c.l.b16 %v308
      %v605 = vunpack.c.h.b16 %v308
      %v606 = vunpack.c.l.b16 %v309
      %v607 = vunpack.c.l.b16 %v310
      %v608 = vunpack.c.h.b16 %v310
      %v609 = vunpack.c.l.b16 %v311
      %v610 = vunpack.c.l.b16 %v312
      %v611 = vunpack.c.h.b16 %v312
      %v612 = vunpack.c.l.b16 %v313
      %v613 = vunpack.c.l.b16 %v314
      %v614 = vunpack.c.h.b16 %v314
      %v615 = vunpack.c.l.b16 %v315
      %v616 = vpack.c.b16 %v547, %v544
      %v617 = vpack.c.b16 %v548, %v545
      %v618 = vpack.c.b16 %v549, %v546
      %v619 = vpack.c.b16 %v553, %v550
      %v620 = vpack.c.b16 %v554, %v551
      %v621 = vpack.c.b16 %v555, %v552
      %v622 = vpack.c.b16 %v559, %v556
      %v623 = vpack.c.b16 %v560, %v557
      %v624 = vpack.c.b16 %v561, %v558
      %v625 = vpack.c.b16 %v565, %v562
      %v626 = vpack.c.b16 %v566, %v563
      %v627 = vpack.c.b16 %v567, %v564
      %v628 = vpack.c.b16 %v571, %v568
      %v629 = vpack.c.b16 %v572, %v569
      %v630 = vpack.c.b16 %v573, %v570
      %v631 = vpack.c.b16 %v577, %v574
      %v632 = vpack.c.b16 %v578, %v575
      %v633 = vpack.c.b16 %v579, %v576
      %v634 = vpack.c.b16 %v583, %v580
      %v635 = vpack.c.b16 %v584, %v581
      %v636 = vpack.c.b16 %v585, %v582
      %v637 = vpack.c.b16 %v589, %v586
      %v638 = vpack.c.b16 %v590, %v587
      %v639 = vpack.c.b16 %v591, %v588
      %v640 = vpack.c.b16 %v595, %v592
      %v641 = vpack.c.b16 %v596, %v593
      %v642 = vpack.c.b16 %v597, %v594
      %v643 = vpack.c.b16 %v601, %v598
      %v644 = vpack.c.b16 %v602, %v599
      %v645 = vpack.c.b16 %v603, %v600
      %v646 = vpack.c.b16 %v607, %v604
      %v647 = vpack.c.b16 %v608, %v605
      %v648 = vpack.c.b16 %v609, %v606
      %v649 = vpack.c.b16 %v613, %v610
      %v650 = vpack.c.b16 %v614, %v611
      %v651 = vpack.c.b16 %v615, %v612
      %v712 = vunpack.c.l.b16 %v316
      %v713 = vunpack.c.l.b16 %v317
      %v714 = vunpack.c.l.b16 %v318
      %v715 = vunpack.c.l.b16 %v319
      %v716 = vunpack.c.l.b16 %v320
      %v717 = vunpack.c.l.b16 %v321
      %v718 = vunpack.c.l.b16 %v322
      %v719 = vunpack.c.l.b16 %v323
      %v720 = vunpack.c.l.b16 %v324
      %v721 = vunpack.c.l.b16 %v325
      %v722 = vunpack.c.l.b16 %v326
      %v723 = vunpack.c.l.b16 %v327
      %v724 = vunpack.c.l.b16 %v328
      %v725 = vunpack.c.l.b16 %v329
      %v726 = vunpack.c.l.b16 %v330
      %v727 = vunpack.c.l.b16 %v331
      %v728 = vunpack.c.l.b16 %v332
      %v729 = vunpack.c.l.b16 %v333
      %v730 = vunpack.c.l.b16 %v334
      %v731 = vunpack.c.l.b16 %v335
      %v732 = vunpack.c.l.b16 %v336
      %v733 = vunpack.c.l.b16 %v337
      %v734 = vunpack.c.l.b16 %v338
      %v735 = vunpack.c.l.b16 %v339
      %v736 = vunpack.c.l.b16 %v340
      %v737 = vunpack.c.l.b16 %v341
      %v738 = vunpack.c.l.b16 %v342
      %v739 = vunpack.c.l.b16 %v343
      %v740 = vunpack.c.l.b16 %v344
      %v741 = vunpack.c.l.b16 %v345
      %v742 = vunpack.c.l.b16 %v346
      %v743 = vunpack.c.l.b16 %v347
      %v744 = vunpack.c.l.b16 %v348
      %v745 = vunpack.c.l.b16 %v349
      %v746 = vunpack.c.l.b16 %v350
      %v747 = vunpack.c.l.b16 %v351
      %v748 = vpack.c.b16 %v713, %v712
      %v749 = vpack.c.b16 %v715, %v714
      %v750 = vpack.c.b16 %v717, %v716
      %v751 = vpack.c.b16 %v719, %v718
      %v752 = vpack.c.b16 %v721, %v720
      %v753 = vpack.c.b16 %v723, %v722
      %v754 = vpack.c.b16 %v725, %v724
      %v755 = vpack.c.b16 %v727, %v726
      %v756 = vpack.c.b16 %v729, %v728
      %v757 = vpack.c.b16 %v731, %v730
      %v758 = vpack.c.b16 %v733, %v732
      %v759 = vpack.c.b16 %v735, %v734
      %v760 = vpack.c.b16 %v737, %v736
      %v761 = vpack.c.b16 %v739, %v738
      %v762 = vpack.c.b16 %v741, %v740
      %v763 = vpack.c.b16 %v743, %v742
      %v764 = vpack.c.b16 %v745, %v744
      %v765 = vpack.c.b16 %v747, %v746
      %vm784 = vcmask 261120
      %v786 = vsel %vm784, %v618, 0
      %v789 = vsel %vm784, %v621, 0
      %v792 = vsel %vm784, %v624, 0
      %v795 = vsel %vm784, %v627, 0
      %v798 = vsel %vm784, %v630, 0
      %v801 = vsel %vm784, %v633, 0
      %v804 = vsel %vm784, %v636, 0
      %v807 = vsel %vm784, %v639, 0
      %v810 = vsel %vm784, %v642, 0
      %v813 = vsel %vm784, %v645, 0
      %v816 = vsel %vm784, %v648, 0
      %v819 = vsel %vm784, %v651, 0
      %821 = vmatprep.subr.bf16.mxu0 0
      %822 = vmatpush1.bf16.msra.mxu0 %v748
      %823 = vmatprep.subr.bf16.mxu0 0
      %824 = vmatpush1.bf16.msra.mxu0 %v749
      %825 = vmatprep.subr.bf16.mxu0 0
      %826 = vmatpush1.bf16.msra.mxu0 %v750
      %827 = vmatprep.subr.bf16.mxu0 0
      %828 = vmatpush1.bf16.msra.mxu0 %v751
      %829 = vmatprep.subr.bf16.mxu0 0
      %830 = vmatpush1.bf16.msra.mxu0 %v752
      %831 = vmatprep.subr.bf16.mxu0 0
      %832 = vmatpush1.bf16.msra.mxu0 %v753
      %833 = vmatprep.subr.bf16.mxu0 0
      %834 = vmatpush1.bf16.msra.mxu0 %v754
      %835 = vmatprep.subr.bf16.mxu0 0
      %836 = vmatpush1.bf16.msra.mxu0 %v755
      %837 = vmatprep.subr.bf16.mxu0 0
      %838 = vmatpush1.bf16.msra.mxu0 %v756
      %839 = vmatprep.subr.bf16.mxu0 0
      %840 = vmatpush1.bf16.msra.mxu0 %v757
      %841 = vmatprep.subr.bf16.mxu0 0
      %842 = vmatpush1.bf16.msra.mxu0 %v758
      %843 = vmatprep.subr.bf16.mxu0 0
      %844 = vmatpush1.bf16.msra.mxu0 %v759
      %845 = vmatprep.subr.bf16.mxu0 0
      %846 = vmatpush1.bf16.msra.mxu0 %v760
      %847 = vmatprep.subr.bf16.mxu0 0
      %848 = vmatpush1.bf16.msra.mxu0 %v761
      %849 = vmatprep.subr.bf16.mxu0 0
      %850 = vmatpush1.bf16.msra.mxu0 %v762
      %851 = vmatprep.subr.bf16.mxu0 0
      %852 = vmatpush1.bf16.msra.mxu0 %v763
      %853 = vmatprep.mubr.bf16.mxu0 %v617
      %854 = vmatmul.mubr.bf16.gmra.mrb[0].mxu0 %v616
      %v855 = vpop.f32.mrb[0].mxu0
      %v856 = vadd.f32 %v379, %v855
      %v857 = vpop.f32.mrb[0].mxu0
      %v858 = vpop.f32.mrb[0].mxu0
      %v859 = vadd.f32 %v384, %v858
      %v860 = vpop.f32.mrb[0].mxu0
      %861 = vmatprep.mubr.bf16.mxu0 %v620
      %862 = vmatmul.mubr.bf16.gmra.mrb[0].mxu0 %v619
      %v863 = vpop.f32.mrb[0].mxu0
      %v864 = vadd.f32 %v389, %v863
      %v865 = vpop.f32.mrb[0].mxu0
      %v866 = vpop.f32.mrb[0].mxu0
      %v867 = vadd.f32 %v394, %v866
      %v868 = vpop.f32.mrb[0].mxu0
      %869 = vmatprep.mubr.bf16.mxu0 %v623
      %870 = vmatmul.mubr.bf16.gmra.mrb[0].mxu0 %v622
      %v871 = vpop.f32.mrb[0].mxu0
      %v872 = vadd.f32 %v399, %v871
      %v873 = vpop.f32.mrb[0].mxu0
      %v874 = vpop.f32.mrb[0].mxu0
      %v875 = vadd.f32 %v404, %v874
      %v876 = vpop.f32.mrb[0].mxu0
      %877 = vmatprep.mubr.bf16.mxu0 %v626
      %878 = vmatmul.mubr.bf16.gmra.mrb[0].mxu0 %v625
      %v879 = vpop.f32.mrb[0].mxu0
      %v880 = vadd.f32 %v409, %v879
      %v881 = vpop.f32.mrb[0].mxu0
      %v882 = vpop.f32.mrb[0].mxu0
      %v883 = vadd.f32 %v414, %v882
      %v884 = vpop.f32.mrb[0].mxu0
      %885 = vmatprep.mubr.bf16.mxu0 %v629
      %886 = vmatmul.mubr.bf16.gmra.mrb[0].mxu0 %v628
      %v887 = vpop.f32.mrb[0].mxu0
      %v888 = vadd.f32 %v419, %v887
      %v889 = vpop.f32.mrb[0].mxu0
      %v890 = vpop.f32.mrb[0].mxu0
      %v891 = vadd.f32 %v424, %v890
      %v892 = vpop.f32.mrb[0].mxu0
      %893 = vmatprep.mubr.bf16.mxu0 %v632
      %894 = vmatmul.mubr.bf16.gmra.mrb[0].mxu0 %v631
      %v895 = vpop.f32.mrb[0].mxu0
      %v896 = vadd.f32 %v429, %v895
      %v897 = vpop.f32.mrb[0].mxu0
      %v898 = vpop.f32.mrb[0].mxu0
      %v899 = vadd.f32 %v434, %v898
      %v900 = vpop.f32.mrb[0].mxu0
      %901 = vmatprep.mubr.bf16.mxu0 %v635
      %902 = vmatmul.mubr.bf16.gmra.mrb[0].mxu0 %v634
      %v903 = vpop.f32.mrb[0].mxu0
      %v904 = vadd.f32 %v439, %v903
      %v905 = vpop.f32.mrb[0].mxu0
      %v906 = vpop.f32.mrb[0].mxu0
      %v907 = vadd.f32 %v444, %v906
      %v908 = vpop.f32.mrb[0].mxu0
      %909 = vmatprep.mubr.bf16.mxu0 %v638
      %910 = vmatmul.mubr.bf16.gmra.mrb[0].mxu0 %v637
      %v911 = vpop.f32.mrb[0].mxu0
      %v912 = vadd.f32 %v449, %v911
      %v913 = vpop.f32.mrb[0].mxu0
      %v914 = vpop.f32.mrb[0].mxu0
      %v915 = vadd.f32 %v454, %v914
      %v916 = vpop.f32.mrb[0].mxu0
      %917 = vmatprep.mubr.bf16.mxu0 %v641
      %918 = vmatmul.mubr.bf16.gmra.mrb[0].mxu0 %v640
      %v919 = vpop.f32.mrb[0].mxu0
      %v920 = vadd.f32 %v459, %v919
      %v921 = vpop.f32.mrb[0].mxu0
      %v922 = vpop.f32.mrb[0].mxu0
      %v923 = vadd.f32 %v464, %v922
      %v924 = vpop.f32.mrb[0].mxu0
      %925 = vmatprep.mubr.bf16.mxu0 %v644
      %926 = vmatmul.mubr.bf16.gmra.mrb[0].mxu0 %v643
      %v927 = vpop.f32.mrb[0].mxu0
      %v928 = vadd.f32 %v469, %v927
      %v929 = vpop.f32.mrb[0].mxu0
      %v930 = vpop.f32.mrb[0].mxu0
      %v931 = vadd.f32 %v474, %v930
      %v932 = vpop.f32.mrb[0].mxu0
      %933 = vmatprep.mubr.bf16.mxu0 %v647
      %934 = vmatmul.mubr.bf16.gmra.mrb[0].mxu0 %v646
      %v935 = vpop.f32.mrb[0].mxu0
      %v936 = vadd.f32 %v479, %v935
      %v937 = vpop.f32.mrb[0].mxu0
      %v938 = vpop.f32.mrb[0].mxu0
      %v939 = vadd.f32 %v484, %v938
      %v940 = vpop.f32.mrb[0].mxu0
      %941 = vmatprep.mubr.bf16.mxu0 %v650
      %942 = vmatmul.mubr.bf16.gmra.mrb[0].mxu0 %v649
      %v943 = vpop.f32.mrb[0].mxu0
      %v944 = vadd.f32 %v489, %v943
      %v945 = vpop.f32.mrb[0].mxu0
      %v946 = vpop.f32.mrb[0].mxu0
      %v947 = vadd.f32 %v494, %v946
      %v948 = vpop.f32.mrb[0].mxu0
      %949 = vdwg.mxu0
      %950 = vmatprep.subr.bf16.mxu0 0
      %951 = vmatpush1.bf16.msra.mxu0 %v764
      %952 = vmatprep.subr.bf16.mxu0 0
      %953 = vmatpush1.bf16.msra.mxu0 %v765
      %954 = vmatprep.subr.bf16.mxu0 0
      %955 = vmatpush1.bf16.msra.mxu0 0
      %956 = vmatprep.subr.bf16.mxu0 0
      %957 = vmatpush1.bf16.msra.mxu0 0
      %958 = vmatprep.subr.bf16.mxu0 0
      %959 = vmatpush1.bf16.msra.mxu0 0
      %960 = vmatprep.subr.bf16.mxu0 0
      %961 = vmatpush1.bf16.msra.mxu0 0
      %962 = vmatprep.subr.bf16.mxu0 0
      %963 = vmatpush1.bf16.msra.mxu0 0
      %964 = vmatprep.subr.bf16.mxu0 0
      %965 = vmatpush1.bf16.msra.mxu0 0
      %966 = vmatprep.subr.bf16.mxu0 0
      %967 = vmatpush1.bf16.msra.mxu0 0
      %968 = vmatprep.subr.bf16.mxu0 0
      %969 = vmatpush1.bf16.msra.mxu0 0
      %970 = vmatprep.subr.bf16.mxu0 0
      %971 = vmatpush1.bf16.msra.mxu0 0
      %972 = vmatprep.subr.bf16.mxu0 0
      %973 = vmatpush1.bf16.msra.mxu0 0
      %974 = vmatprep.subr.bf16.mxu0 0
      %975 = vmatpush1.bf16.msra.mxu0 0
      %976 = vmatprep.subr.bf16.mxu0 0
      %977 = vmatpush1.bf16.msra.mxu0 0
      %978 = vmatprep.subr.bf16.mxu0 0
      %979 = vmatpush1.bf16.msra.mxu0 0
      %980 = vmatprep.subr.bf16.mxu0 0
      %981 = vmatpush1.bf16.msra.mxu0 0
      %982 = vmatprep.mubr.bf16.mxu0 0
      %983 = vmatmul.mubr.bf16.gmra.mrb[0].mxu0 %v786
      %v984 = vpop.f32.mrb[0].mxu0
      %v985 = vadd.f32 %v856, %v984
      %v986 = vpop.f32.mrb[0].mxu0
      %v987 = vpop.f32.mrb[0].mxu0
      %v988 = vadd.f32 %v859, %v987
      %v989 = vpop.f32.mrb[0].mxu0
      %990 = vmatprep.mubr.bf16.mxu0 0
      %991 = vmatmul.mubr.bf16.gmra.mrb[0].mxu0 %v789
      %v992 = vpop.f32.mrb[0].mxu0
      %v993 = vadd.f32 %v864, %v992
      %v994 = vpop.f32.mrb[0].mxu0
      %v995 = vpop.f32.mrb[0].mxu0
      %v996 = vadd.f32 %v867, %v995
      %v997 = vpop.f32.mrb[0].mxu0
      %998 = vmatprep.mubr.bf16.mxu0 0
      %999 = vmatmul.mubr.bf16.gmra.mrb[0].mxu0 %v792
      %v1000 = vpop.f32.mrb[0].mxu0
      %v1001 = vadd.f32 %v872, %v1000
      %v1002 = vpop.f32.mrb[0].mxu0
      %v1003 = vpop.f32.mrb[0].mxu0
      %v1004 = vadd.f32 %v875, %v1003
      %v1005 = vpop.f32.mrb[0].mxu0
      %1006 = vmatprep.mubr.bf16.mxu0 0
      %1007 = vmatmul.mubr.bf16.gmra.mrb[0].mxu0 %v795
      %v1008 = vpop.f32.mrb[0].mxu0
      %v1009 = vadd.f32 %v880, %v1008
      %v1010 = vpop.f32.mrb[0].mxu0
      %v1011 = vpop.f32.mrb[0].mxu0
      %v1012 = vadd.f32 %v883, %v1011
      %v1013 = vpop.f32.mrb[0].mxu0
      %1014 = vmatprep.mubr.bf16.mxu0 0
      %1015 = vmatmul.mubr.bf16.gmra.mrb[0].mxu0 %v798
      %v1016 = vpop.f32.mrb[0].mxu0
      %v1017 = vadd.f32 %v888, %v1016
      %v1018 = vpop.f32.mrb[0].mxu0
      %v1019 = vpop.f32.mrb[0].mxu0
      %v1020 = vadd.f32 %v891, %v1019
      %v1021 = vpop.f32.mrb[0].mxu0
      %1022 = vmatprep.mubr.bf16.mxu0 0
      %1023 = vmatmul.mubr.bf16.gmra.mrb[0].mxu0 %v801
      %v1024 = vpop.f32.mrb[0].mxu0
      %v1025 = vadd.f32 %v896, %v1024
      %v1026 = vpop.f32.mrb[0].mxu0
      %v1027 = vpop.f32.mrb[0].mxu0
      %v1028 = vadd.f32 %v899, %v1027
      %v1029 = vpop.f32.mrb[0].mxu0
      %1030 = vmatprep.mubr.bf16.mxu0 0
      %1031 = vmatmul.mubr.bf16.gmra.mrb[0].mxu0 %v804
      %v1032 = vpop.f32.mrb[0].mxu0
      %v1033 = vadd.f32 %v904, %v1032
      %v1034 = vpop.f32.mrb[0].mxu0
      %v1035 = vpop.f32.mrb[0].mxu0
      %v1036 = vadd.f32 %v907, %v1035
      %v1037 = vpop.f32.mrb[0].mxu0
      %1038 = vmatprep.mubr.bf16.mxu0 0
      %1039 = vmatmul.mubr.bf16.gmra.mrb[0].mxu0 %v807
      %v1040 = vpop.f32.mrb[0].mxu0
      %v1041 = vadd.f32 %v912, %v1040
      %v1042 = vpop.f32.mrb[0].mxu0
      %v1043 = vpop.f32.mrb[0].mxu0
      %v1044 = vadd.f32 %v915, %v1043
      %v1045 = vpop.f32.mrb[0].mxu0
      %1046 = vmatprep.mubr.bf16.mxu0 0
      %1047 = vmatmul.mubr.bf16.gmra.mrb[0].mxu0 %v810
      %v1048 = vpop.f32.mrb[0].mxu0
      %v1049 = vadd.f32 %v920, %v1048
      %v1050 = vpop.f32.mrb[0].mxu0
      %v1051 = vpop.f32.mrb[0].mxu0
      %v1052 = vadd.f32 %v923, %v1051
      %v1053 = vpop.f32.mrb[0].mxu0
      %1054 = vmatprep.mubr.bf16.mxu0 0
      %1055 = vmatmul.mubr.bf16.gmra.mrb[0].mxu0 %v813
      %v1056 = vpop.f32.mrb[0].mxu0
      %v1057 = vadd.f32 %v928, %v1056
      %v1058 = vpop.f32.mrb[0].mxu0
      %v1059 = vpop.f32.mrb[0].mxu0
      %v1060 = vadd.f32 %v931, %v1059
      %v1061 = vpop.f32.mrb[0].mxu0
      %1062 = vmatprep.mubr.bf16.mxu0 0
      %1063 = vmatmul.mubr.bf16.gmra.mrb[0].mxu0 %v816
      %v1064 = vpop.f32.mrb[0].mxu0
      %v1065 = vadd.f32 %v936, %v1064
      %v1066 = vpop.f32.mrb[0].mxu0
      %v1067 = vpop.f32.mrb[0].mxu0
      %v1068 = vadd.f32 %v939, %v1067
      %v1069 = vpop.f32.mrb[0].mxu0
      %1070 = vmatprep.mubr.bf16.mxu0 0
      %1071 = vmatmul.mubr.bf16.gmra.mrb[0].mxu0 %v819
      %v1072 = vpop.f32.mrb[0].mxu0
      %v1073 = vadd.f32 %v944, %v1072
      %v1074 = vpop.f32.mrb[0].mxu0
      %v1075 = vpop.f32.mrb[0].mxu0
      %v1076 = vadd.f32 %v947, %v1075
      %v1077 = vpop.f32.mrb[0].mxu0
      %1078 = vdwg.mxu0
      %v1079 = vpack.c.bf16 %v988, %v985
      %v1080 = vpack.c.bf16 %v996, %v993
      %v1081 = vpack.c.bf16 %v1004, %v1001
      %v1082 = vpack.c.bf16 %v1012, %v1009
      %v1083 = vpack.c.bf16 %v1020, %v1017
      %v1084 = vpack.c.bf16 %v1028, %v1025
      %v1085 = vpack.c.bf16 %v1036, %v1033
      %v1086 = vpack.c.bf16 %v1044, %v1041
      %v1087 = vpack.c.bf16 %v1052, %v1049
      %v1088 = vpack.c.bf16 %v1060, %v1057
      %v1089 = vpack.c.bf16 %v1068, %v1065
      %v1090 = vpack.c.bf16 %v1076, %v1073
      %v1103 = vunpack.c.l.b16 %v1079
      %v1104 = vunpack.c.h.b16 %v1079
      %v1105 = vunpack.c.l.b16 %v1080
      %v1106 = vunpack.c.h.b16 %v1080
      %v1107 = vunpack.c.l.b16 %v1081
      %v1108 = vunpack.c.h.b16 %v1081
      %v1109 = vunpack.c.l.b16 %v1082
      %v1110 = vunpack.c.h.b16 %v1082
      %v1111 = vunpack.c.l.b16 %v1083
      %v1112 = vunpack.c.h.b16 %v1083
      %v1113 = vunpack.c.l.b16 %v1084
      %v1114 = vunpack.c.h.b16 %v1084
      %v1115 = vunpack.c.l.b16 %v1085
      %v1116 = vunpack.c.h.b16 %v1085
      %v1117 = vunpack.c.l.b16 %v1086
      %v1118 = vunpack.c.h.b16 %v1086
      %v1119 = vunpack.c.l.b16 %v1087
      %v1120 = vunpack.c.h.b16 %v1087
      %v1121 = vunpack.c.l.b16 %v1088
      %v1122 = vunpack.c.h.b16 %v1088
      %v1123 = vunpack.c.l.b16 %v1089
      %v1124 = vunpack.c.h.b16 %v1089
      %v1125 = vunpack.c.l.b16 %v1090
      %v1126 = vunpack.c.h.b16 %v1090
      %v1127 = vpack.c.b16 %v1103, %v1103
      %v1128 = vpack.c.b16 %v1104, %v1104
      %v1129 = vpack.c.b16 %v1105, %v1105
      %v1130 = vpack.c.b16 %v1106, %v1106
      %v1131 = vpack.c.b16 %v1107, %v1107
      %v1132 = vpack.c.b16 %v1108, %v1108
      %v1133 = vpack.c.b16 %v1109, %v1109
      %v1134 = vpack.c.b16 %v1110, %v1110
      %v1135 = vpack.c.b16 %v1111, %v1111
      %v1136 = vpack.c.b16 %v1112, %v1112
      %v1137 = vpack.c.b16 %v1113, %v1113
      %v1138 = vpack.c.b16 %v1114, %v1114
      %v1139 = vpack.c.b16 %v1115, %v1115
      %v1140 = vpack.c.b16 %v1116, %v1116
      %v1141 = vpack.c.b16 %v1117, %v1117
      %v1142 = vpack.c.b16 %v1118, %v1118
      %v1143 = vpack.c.b16 %v1119, %v1119
      %v1144 = vpack.c.b16 %v1120, %v1120
      %v1145 = vpack.c.b16 %v1121, %v1121
      %v1146 = vpack.c.b16 %v1122, %v1122
      %v1147 = vpack.c.b16 %v1123, %v1123
      %v1148 = vpack.c.b16 %v1124, %v1124
      %v1149 = vpack.c.b16 %v1125, %v1125
      %v1150 = vpack.c.b16 %v1126, %v1126
      %1175 = vst [vmem:[%s265] sm:$0xf] %v1127
      %1176 = vst [vmem:[%s265 + $0x4] sm:$0xf] %v1128
      %1177 = vst [vmem:[%s265 + $0x8] sm:$0xf] %v1129
      %1178 = vst [vmem:[%s265 + $0xc] sm:$0xf] %v1130
      %1179 = vst [vmem:[%s265 + $0x10] sm:$0xf] %v1131
      %1180 = vst [vmem:[%s265 + $0x14] sm:$0xf] %v1132
      %1181 = vst [vmem:[%s265 + $0x18] sm:$0xf] %v1133
      %1182 = vst [vmem:[%s265 + $0x1c] sm:$0xf] %v1134
      %1183 = vst [vmem:[%s265 + $0x20] sm:$0xf] %v1135
      %1184 = vst [vmem:[%s265 + $0x24] sm:$0xf] %v1136
      %1185 = vst [vmem:[%s265 + $0x28] sm:$0xf] %v1137
      %1186 = vst [vmem:[%s265 + $0x2c] sm:$0xf] %v1138
      %1187 = vst [vmem:[%s265 + $0x30] sm:$0xf] %v1139
      %1188 = vst [vmem:[%s265 + $0x34] sm:$0xf] %v1140
      %1189 = vst [vmem:[%s265 + $0x38] sm:$0xf] %v1141
      %1190 = vst [vmem:[%s265 + $0x3c] sm:$0xf] %v1142
      %1191 = vst [vmem:[%s265 + $0x40] sm:$0xf] %v1143
      %1192 = vst [vmem:[%s265 + $0x44] sm:$0xf] %v1144
      %1193 = vst [vmem:[%s265 + $0x48] sm:$0xf] %v1145
      %1194 = vst [vmem:[%s265 + $0x4c] sm:$0xf] %v1146
      %1195 = vst [vmem:[%s265 + $0x50] sm:$0xf] %v1147
      %1196 = vst [vmem:[%s265 + $0x54] sm:$0xf] %v1148
      %1197 = vst [vmem:[%s265 + $0x58] sm:$0xf] %v1149
      %1198 = vst [vmem:[%s265 + $0x5c] sm:$0xf] %v1150
      %s1199 = smul.u32 24, %s20
      %p1200 = scmp.lt.s32.totalorder %s19, 1
      %s1201 = scalar_select %p1200, %s19, 1
      %p1202 = scmp.lt.s32.totalorder %s1199, 23
      %s1203 = scalar_select %p1202, %s1199, 23
      %p1204 = scmp.lt.s32.totalorder %s21, 0
      %s1205 = scalar_select %p1204, %s21, 0
      %s1206 = sadd.s32 %s1205, %s1203
      %s1207 = smul.addr %s1201, 24
      %s1208 = sadd.s32 %s1206, %s1207
      %s1209 = smul.addr %s1208, 4
      %s1210 = scalar_lea.vmem %s3, %s1209
      // Predicated region
      $region33: #{upchannel_ban_forward.4} parent=31 // pred_check
        %p1211 = pneg %p135
      $region34: #{upchannel_ban_forward.4} parent=31 // pred_check_branch
        %1213 = sbr.rel (%p1211) target = $region36
      $region35: #{upchannel_ban_forward.4} parent=31 // pred_region
        %s1214 = smul.u32 24, %s20
      $region36: #{upchannel_ban_forward.4} parent=31 // pred_fallthru
        _
    $region32: #{upchannel_ban_forward.4} parent=5 // pred_fallthru
      _
    %p1215 = scmp.le.s32.totalorder 2, %s9
    // Predicated region
    $region37: #{upchannel_ban_forward.4} parent=5 // pred_check
      %p1216 = pneg %p1215
    $region38: #{upchannel_ban_forward.4} parent=5 // pred_check_branch
      %1218 = sbr.rel (%p1216) target = $region40
    $region39: #{upchannel_ban_forward.4} parent=5 // pred_region
      %s1219 = ssub.s32 %s9, 2
      // Predicated region
      $region41: #{upchannel_ban_forward.4} parent=39 // pred_check
        %p1220 = pneg %p141
      $region42: #{upchannel_ban_forward.4} parent=39 // pred_check_branch
        %1222 = sbr.rel (%p1220) target = $region44
      $region43: #{upchannel_ban_forward.4} parent=39 // pred_region
        %s1223 = smul.u32 24, %s23
        %p1224 = scmp.lt.s32.totalorder %s22, 1
        %s1225 = scalar_select %p1224, %s22, 1
        %p1226 = scmp.lt.s32.totalorder %s1223, 23
        %s1227 = scalar_select %p1226, %s1223, 23
        %p1228 = scmp.lt.s32.totalorder %s24, 0
        %s1229 = scalar_select %p1228, %s24, 0
        %s1230 = sadd.s32 %s1229, %s1227
        %s1231 = smul.addr %s1225, 24
        %s1232 = sadd.s32 %s1230, %s1231
        %s1233 = smul.addr %s1232, 4
        %s1234 = scalar_lea.vmem %s3, %s1233
      $region44: #{upchannel_ban_forward.4} parent=39 // pred_fallthru
        _
    $region40: #{upchannel_ban_forward.4} parent=5 // pred_fallthru
      _
  $region6: #{upchannel_ban_forward.4} parent=0 // loop_footer
    %s13 = sadd.s32 1, %s9
  $region7: #{upchannel_ban_forward.4} parent=0 // loop_footer_branch
    %8 = sbr.rel target = $region3
  $region8: #{upchannel_ban_forward.4} parent=0 // loop_exit
    _

// kernel: upchannel_ban_forward.7
$region0: #{upchannel_ban_forward.7}
  #allocation0 [shape = 'u32[]', space=smem, size = 0x4, offset = 0x4, fixed_abs, tag = 'smem constant byte address 0x4 - core index']
  #allocation1 [shape = 'u32[144,128]{1,0:T(1,128)}', space=vmem, size = 0x12000, scoped, tag = 'internal scratch']
  %s0 = inlined_call_operand.vmem [shape: bf16[2,1024,128], index: 0, kind: input, shape index: {}]
  %s1 = inlined_call_operand.vmem [shape: bf16[2,4,512], index: 1, kind: input, shape index: {}]
  %s2 = inlined_call_operand.vmem [shape: f32[4,1], index: 2, kind: input, shape index: {}]
  %s3 = inlined_call_operand.vmem [shape: f32[2,4,128], index: 3, kind: output, shape index: {}]
  %s4 = sld [smem:[#allocation0]]
  $region45: #{upchannel_ban_forward.7} parent=0
    _
  %s6 = ssub.s32 1, %s4
  %s7 = scalar_select 0, %s6, %s4
  loop: start=0, step=1, limit=4
  $region2: #{upchannel_ban_forward.7} parent=0 // loop_pre_header
    _
  $region3: #{upchannel_ban_forward.7} parent=0 // loop_header
    %s9 = sphi 0, %s13
    %p10 = scmp.ge.s32.totalorder %s9, 4
    %s16 = sphi 0, %s28
    %s17 = sphi 0, %s24
    %s18 = sphi 0, %s16
    %s19 = sphi 0, %s17
    %s20 = sphi 0, %s18
    %s21 = sphi 0, %s19
    %s33 = sphi 0, %s35
    %s36 = sphi 0, %s33
    %s37 = sphi 0, %s36
    %s53 = sphi 0, %s37
    %s59 = sphi 0, %s61
    %s62 = sphi 0, %s59
    %s63 = sphi 0, %s62
    %s79 = sphi 0, %s63
    %s83 = sphi 0, %s83
    %s85 = sphi 0, %s83
    %s86 = sphi 0, %s85
    %s100 = sphi 0, %s86
    %s108 = sphi 0, %s110
    %s111 = sphi 0, %s108
    %s112 = sphi 0, %s111
    %s128 = sphi 0, %s112
  $region4: #{upchannel_ban_forward.7} parent=0 // loop_header_branch
    %12 = sbr.rel (%p10) target = $region8
  $region5: #{upchannel_ban_forward.7} parent=0 // loop_body
    %s14 = ssub.s32 %s9, 1
    %s15 = ssub.s32 %s9, 2
    %s22 = sadd.s32 1, %s17
    %p23 = scmp.ge.s32.totalorder %s22, 1
    %s24 = scalar_select %p23, 0, %s22
    %s25 = sadd.s32 1, %s16
    %s26 = scalar_select %p23, %s25, %s16
    %p27 = scmp.ge.s32.totalorder %s26, 2
    %s28 = scalar_select %p27, 0, %s26
    %s29 = ssub.s32 %s16, %s28
    %s30 = ssub.s32 %s17, %s24
    %s31 = sor.u32 %s29, %s30
    %p32 = scmp.eq.s32.totalorder %s31, 0
    %s34 = sadd.s32 %s33, 1
    %s35 = scalar_select %p32, %s33, %s34
    %p38 = pneg %p32
    %p39 = scmp.eq.s32.totalorder %s9, 1
    %p40 = por %p38, %p39
    %p41 = scmp.ne.s32.totalorder %s33, %s36
    %p42 = scmp.eq.s32.totalorder %s9, 0
    %p43 = por %p41, %p42
    %p44 = scmp.ne.s32.totalorder %s33, %s36
    %p45 = scmp.eq.s32.totalorder %s14, 1
    %p46 = por %p44, %p45
    %p47 = scmp.ne.s32.totalorder %s36, %s37
    %p48 = scmp.eq.s32.totalorder %s14, 0
    %p49 = por %p47, %p48
    %p50 = scmp.ne.s32.totalorder %s36, %s37
    %p51 = scmp.eq.s32.totalorder %s15, 1
    %p52 = por %p50, %p51
    %p54 = scmp.ne.s32.totalorder %s37, %s53
    %p55 = scmp.eq.s32.totalorder %s15, 0
    %p56 = por %p54, %p55
    %s57 = ssub.s32 %s16, %s28
    %p58 = scmp.eq.s32.totalorder %s57, 0
    %s60 = sadd.s32 %s59, 1
    %s61 = scalar_select %p58, %s59, %s60
    %p64 = pneg %p58
    %p65 = scmp.eq.s32.totalorder %s9, 1
    %p66 = por %p64, %p65
    %p67 = scmp.ne.s32.totalorder %s59, %s62
    %p68 = scmp.eq.s32.totalorder %s9, 0
    %p69 = por %p67, %p68
    %p70 = scmp.ne.s32.totalorder %s59, %s62
    %p71 = scmp.eq.s32.totalorder %s14, 1
    %p72 = por %p70, %p71
    %p73 = scmp.ne.s32.totalorder %s62, %s63
    %p74 = scmp.eq.s32.totalorder %s14, 0
    %p75 = por %p73, %p74
    %p76 = scmp.ne.s32.totalorder %s62, %s63
    %p77 = scmp.eq.s32.totalorder %s15, 1
    %p78 = por %p76, %p77
    %p80 = scmp.ne.s32.totalorder %s63, %s79
    %p81 = scmp.eq.s32.totalorder %s15, 0
    %p82 = por %p80, %p81
    %s84 = sadd.s32 %s83, 1
    %p87 = scmp.eq.s32.totalorder %s9, 1
    %p88 = scmp.ne.s32.totalorder %s83, %s85
    %p89 = scmp.eq.s32.totalorder %s9, 0
    %p90 = por %p88, %p89
    %p91 = scmp.ne.s32.totalorder %s83, %s85
    %p92 = scmp.eq.s32.totalorder %s14, 1
    %p93 = por %p91, %p92
    %p94 = scmp.ne.s32.totalorder %s85, %s86
    %p95 = scmp.eq.s32.totalorder %s14, 0
    %p96 = por %p94, %p95
    %p97 = scmp.ne.s32.totalorder %s85, %s86
    %p98 = scmp.eq.s32.totalorder %s15, 1
    %p99 = por %p97, %p98
    %p101 = scmp.ne.s32.totalorder %s86, %s100
    %p102 = scmp.eq.s32.totalorder %s15, 0
    %p103 = por %p101, %p102
    %s104 = ssub.s32 %s16, %s28
    %s105 = ssub.s32 %s17, %s24
    %s106 = sor.u32 %s104, %s105
    %p107 = scmp.eq.s32.totalorder %s106, 0
    %s109 = sadd.s32 %s108, 1
    %s110 = scalar_select %p107, %s108, %s109
    %p113 = pneg %p107
    %p114 = scmp.eq.s32.totalorder %s9, 1
    %p115 = por %p113, %p114
    %p116 = scmp.ne.s32.totalorder %s108, %s111
    %p117 = scmp.eq.s32.totalorder %s9, 0
    %p118 = por %p116, %p117
    %p119 = scmp.ne.s32.totalorder %s108, %s111
    %p120 = scmp.eq.s32.totalorder %s14, 1
    %p121 = por %p119, %p120
    %p122 = scmp.ne.s32.totalorder %s111, %s112
    %p123 = scmp.eq.s32.totalorder %s14, 0
    %p124 = por %p122, %p123
    %p125 = scmp.ne.s32.totalorder %s111, %s112
    %p126 = scmp.eq.s32.totalorder %s15, 1
    %p127 = por %p125, %p126
    %p129 = scmp.ne.s32.totalorder %s112, %s128
    %p130 = scmp.eq.s32.totalorder %s15, 0
    %p131 = por %p129, %p130
    %p132 = scmp.le.s32.totalorder 1, %s9
    %p133 = scmp.lt.s32.totalorder %s9, 3
    %p134 = pnand %p132, %p133
    %p135 = pneg %p134
    // Predicated region
    $region9: #{upchannel_ban_forward.7} parent=5 // pred_check
      _
    $region10: #{upchannel_ban_forward.7} parent=5 // pred_check_branch
      %137 = sbr.rel (%p134) target = $region12
    $region11: #{upchannel_ban_forward.7} parent=5 // pred_region
      %s138 = ssub.s32 %s9, 1
      // Predicated region
      $region13: #{upchannel_ban_forward.7} parent=11 // pred_check
        %p139 = pneg %p96
      $region14: #{upchannel_ban_forward.7} parent=11 // pred_check_branch
        %141 = sbr.rel (%p139) target = $region16
      $region15: #{upchannel_ban_forward.7} parent=11 // pred_region
        _
      $region16: #{upchannel_ban_forward.7} parent=11 // pred_fallthru
        _
    $region12: #{upchannel_ban_forward.7} parent=5 // pred_fallthru
      _
    %p142 = scmp.lt.s32.totalorder %s9, 2
    // Predicated region
    $region17: #{upchannel_ban_forward.7} parent=5 // pred_check
      %p143 = pneg %p142
    $region18: #{upchannel_ban_forward.7} parent=5 // pred_check_branch
      %145 = sbr.rel (%p143) target = $region20
    $region19: #{upchannel_ban_forward.7} parent=5 // pred_region
      // Predicated region
      $region21: #{upchannel_ban_forward.7} parent=19 // pred_check
        %p146 = pneg %p43
      $region22: #{upchannel_ban_forward.7} parent=19 // pred_check_branch
        %148 = sbr.rel (%p146) target = $region24
      $region23: #{upchannel_ban_forward.7} parent=19 // pred_region
        %p149 = scmp.lt.s32.totalorder %s16, 1
        %s150 = scalar_select %p149, %s16, 1
        %p151 = scmp.lt.s32.totalorder %s17, 0
        %s152 = scalar_select %p151, %s17, 0
        %s153 = sadd.s32 %s152, 64
        %s154 = smul.addr %s150, 128
        %s155 = sadd.s32 %s153, %s154
        %s156 = smul.addr %s155, 4
        %s157 = scalar_lea.vmem %s0, %s156
      $region24: #{upchannel_ban_forward.7} parent=19 // pred_fallthru
        _
      // Predicated region
      $region25: #{upchannel_ban_forward.7} parent=19 // pred_check
        %p158 = pneg %p69
      $region26: #{upchannel_ban_forward.7} parent=19 // pred_check_branch
        %160 = sbr.rel (%p158) target = $region28
      $region27: #{upchannel_ban_forward.7} parent=19 // pred_region
        %p161 = scmp.lt.s32.totalorder %s16, 1
        %s162 = scalar_select %p161, %s16, 1
        %s163 = smul.addr %s162, 4
        %s164 = smul.addr %s163, 2
        %s165 = scalar_lea.vmem %s1, %s164
      $region28: #{upchannel_ban_forward.7} parent=19 // pred_fallthru
        _
    $region20: #{upchannel_ban_forward.7} parent=5 // pred_fallthru
      _
    %p166 = scmp.le.s32.totalorder 1, %s9
    %p167 = scmp.lt.s32.totalorder %s9, 3
    %p168 = pnand %p166, %p167
    %p169 = pneg %p168
    // Predicated region
    $region29: #{upchannel_ban_forward.7} parent=5 // pred_check
      _
    $region30: #{upchannel_ban_forward.7} parent=5 // pred_check_branch
      %171 = sbr.rel (%p168) target = $region32
    $region31: #{upchannel_ban_forward.7} parent=5 // pred_region
      %s172 = ssub.s32 %s9, 1
      %p173 = scmp.lt.s32.totalorder %s18, 1
      %s174 = scalar_select %p173, %s18, 1
      %p175 = scmp.lt.s32.totalorder %s19, 0
      %s176 = scalar_select %p175, %s19, 0
      %s177 = sadd.s32 %s176, 64
      %s178 = smul.addr %s174, 128
      %s179 = sadd.s32 %s177, %s178
      %s180 = smul.addr %s179, 4
      %s181 = scalar_lea.vmem %s0, %s180
      %p182 = pneg %p49
      %p183 = pneg %p46
      %p184 = scmp.lt.s32.totalorder %s18, 1
      %s185 = scalar_select %p184, %s18, 1
      %s186 = smul.addr %s185, 4
      %s187 = smul.addr %s186, 2
      %s188 = scalar_lea.vmem %s1, %s187
      %p189 = pneg %p75
      %p190 = pneg %p72
      %p191 = pneg %p96
      %p192 = pneg %p93
      %p193 = pneg %p124
      %p194 = pneg %p121
      %p195 = scmp.lt.s32.totalorder %s18, 1
      %s196 = scalar_select %p195, %s18, 1
      %p197 = scmp.lt.s32.totalorder %s19, 0
      %s198 = scalar_select %p197, %s19, 0
      %s199 = sadd.s32 %s198, %s196
      %s200 = smul.addr %s199, 4
      %s201 = scalar_lea.vmem %s3, %s200
      %p202 = scmp.lt.s32.totalorder %s18, 1
      %s203 = scalar_select %p202, %s18, 1
      %p204 = scmp.lt.s32.totalorder %s19, 0
      %s205 = scalar_select %p204, %s19, 0
      %s206 = sadd.s32 %s205, 64
      %s207 = smul.addr %s203, 128
      %s208 = sadd.s32 %s206, %s207
      %s209 = smul.addr %s208, 4
      %s210 = scalar_lea.vmem %s0, %s209
      %p211 = scmp.lt.s32.totalorder %s18, 1
      %s212 = scalar_select %p211, %s18, 1
      %s213 = smul.addr %s212, 4
      %s214 = smul.addr %s213, 2
      %s215 = scalar_lea.vmem %s1, %s214
      %p216 = scmp.lt.s32.totalorder %s18, 1
      %s217 = scalar_select %p216, %s18, 1
      %p218 = scmp.lt.s32.totalorder %s19, 0
      %s219 = scalar_select %p218, %s19, 0
      %s220 = sadd.s32 %s219, %s217
      %s221 = smul.addr %s220, 4
      %s222 = scalar_lea.vmem %s3, %s221
      %v224 = vld [vmem:[%s215] sm:$0xff]
      %v225 = vld [vmem:[%s210] sm:$0xf]
      %v226 = vld [vmem:[%s210 + $0x4] sm:$0xf]
      %v227 = vld [vmem:[%s210 + $0x8] sm:$0xf]
      %v228 = vld [vmem:[%s210 + $0xc] sm:$0xf]
      %v229 = vld [vmem:[%s210 + $0x10] sm:$0xf]
      %v230 = vld [vmem:[%s210 + $0x14] sm:$0xf]
      %v231 = vld [vmem:[%s210 + $0x18] sm:$0xf]
      %v232 = vld [vmem:[%s210 + $0x1c] sm:$0xf]
      %v233 = vld [vmem:[%s210 + $0x20] sm:$0xf]
      %v234 = vld [vmem:[%s210 + $0x24] sm:$0xf]
      %v235 = vld [vmem:[%s210 + $0x28] sm:$0xf]
      %v236 = vld [vmem:[%s210 + $0x2c] sm:$0xf]
      %v237 = vld [vmem:[%s210 + $0x30] sm:$0xf]
      %v238 = vld [vmem:[%s210 + $0x34] sm:$0xf]
      %v239 = vld [vmem:[%s210 + $0x38] sm:$0xf]
      %v240 = vld [vmem:[%s210 + $0x3c] sm:$0xf]
      %v241 = vld [vmem:[%s210 + $0x40] sm:$0xf]
      %v242 = vld [vmem:[%s210 + $0x44] sm:$0xf]
      %v243 = vld [vmem:[%s210 + $0x48] sm:$0xf]
      %v244 = vld [vmem:[%s210 + $0x4c] sm:$0xf]
      %v245 = vld [vmem:[%s210 + $0x50] sm:$0xf]
      %v246 = vld [vmem:[%s210 + $0x54] sm:$0xf]
      %v247 = vld [vmem:[%s210 + $0x58] sm:$0xf]
      %v248 = vld [vmem:[%s210 + $0x5c] sm:$0xf]
      %v249 = vld [vmem:[%s210 + $0x60] sm:$0xf]
      %v250 = vld [vmem:[%s210 + $0x64] sm:$0xf]
      %v251 = vld [vmem:[%s210 + $0x68] sm:$0xf]
      %v252 = vld [vmem:[%s210 + $0x6c] sm:$0xf]
      %v253 = vld [vmem:[%s210 + $0x70] sm:$0xf]
      %v254 = vld [vmem:[%s210 + $0x74] sm:$0xf]
      %v255 = vld [vmem:[%s210 + $0x78] sm:$0xf]
      %v256 = vld [vmem:[%s210 + $0x7c] sm:$0xf]
      %v257 = vld [vmem:[%s210 + $0x80] sm:$0xf]
      %v258 = vld [vmem:[%s210 + $0x84] sm:$0xf]
      %v259 = vld [vmem:[%s210 + $0x88] sm:$0xf]
      %v260 = vld [vmem:[%s210 + $0x8c] sm:$0xf]
      %v261 = vld [vmem:[%s210 + $0x90] sm:$0xf]
      %v262 = vld [vmem:[%s210 + $0x94] sm:$0xf]
      %v263 = vld [vmem:[%s210 + $0x98] sm:$0xf]
      %v264 = vld [vmem:[%s210 + $0x9c] sm:$0xf]
      %v265 = vld [vmem:[%s210 + $0xa0] sm:$0xf]
      %v266 = vld [vmem:[%s210 + $0xa4] sm:$0xf]
      %v267 = vld [vmem:[%s210 + $0xa8] sm:$0xf]
      %v268 = vld [vmem:[%s210 + $0xac] sm:$0xf]
      %v269 = vld [vmem:[%s210 + $0xb0] sm:$0xf]
      %v270 = vld [vmem:[%s210 + $0xb4] sm:$0xf]
      %v271 = vld [vmem:[%s210 + $0xb8] sm:$0xf]
      %v272 = vld [vmem:[%s210 + $0xbc] sm:$0xf]
      %v273 = vld [vmem:[%s210 + $0xc0] sm:$0xf]
      %v274 = vld [vmem:[%s210 + $0xc4] sm:$0xf]
      %v275 = vld [vmem:[%s210 + $0xc8] sm:$0xf]
      %v276 = vld [vmem:[%s210 + $0xcc] sm:$0xf]
      %v277 = vld [vmem:[%s210 + $0xd0] sm:$0xf]
      %v278 = vld [vmem:[%s210 + $0xd4] sm:$0xf]
      %v279 = vld [vmem:[%s210 + $0xd8] sm:$0xf]
      %v280 = vld [vmem:[%s210 + $0xdc] sm:$0xf]
      %v281 = vld [vmem:[%s210 + $0xe0] sm:$0xf]
      %v282 = vld [vmem:[%s210 + $0xe4] sm:$0xf]
      %v283 = vld [vmem:[%s210 + $0xe8] sm:$0xf]
      %v284 = vld [vmem:[%s210 + $0xec] sm:$0xf]
      %v285 = vld [vmem:[%s210 + $0xf0] sm:$0xf]
      %v286 = vld [vmem:[%s210 + $0xf4] sm:$0xf]
      %v287 = vld [vmem:[%s210 + $0xf8] sm:$0xf]
      %v288 = vld [vmem:[%s210 + $0xfc] sm:$0xf]
      %v289 = vld [vmem:[%s2] sm:$0xf]
      %291 = vset.pattern.permute.xlu0 0
      %292 = vperm.xlu0 %291, %v289
      %v293 = vpop.permute.xlu0 %292
      %v296 = vcombine.high %v224, %v224
      %v298 = vunpack.c.l.s4 1983009808
      %v299 = vunpack.c.0.s8 %v298
      %v300 = vlaneseq
      %v301 = vshrl.u32 %v300, 7
      %v302 = vsub.s32 %v299, %v301
      %v303 = vrot.slane %v224, %v302
      %v305 = vunpack.c.l.s4 1983009808
      %v306 = vunpack.c.0.s8 %v305
      %v307 = vlaneseq
      %v308 = vshrl.u32 %v307, 7
      %v309 = vsub.s32 %v306, %v308
      %v310 = vrot.slane %v296, %v309
      %v311 = vcombine.high %v303, %v303
      %v312 = vcombine.high %v310, %v310
      %v381 = vunpack.c.l.b16 %v225
      %v382 = vunpack.c.l.b16 %v226
      %v383 = vunpack.c.l.b16 %v227
      %v384 = vunpack.c.l.b16 %v228
      %v385 = vunpack.c.l.b16 %v229
      %v386 = vunpack.c.l.b16 %v230
      %v387 = vunpack.c.l.b16 %v231
      %v388 = vunpack.c.l.b16 %v232
      %v389 = vunpack.c.l.b16 %v233
      %v390 = vunpack.c.l.b16 %v234
      %v391 = vunpack.c.l.b16 %v235
      %v392 = vunpack.c.l.b16 %v236
      %v393 = vunpack.c.l.b16 %v237
      %v394 = vunpack.c.l.b16 %v238
      %v395 = vunpack.c.l.b16 %v239
      %v396 = vunpack.c.l.b16 %v240
      %v397 = vunpack.c.l.b16 %v241
      %v398 = vunpack.c.l.b16 %v242
      %v399 = vunpack.c.l.b16 %v243
      %v400 = vunpack.c.l.b16 %v244
      %v401 = vunpack.c.l.b16 %v245
      %v402 = vunpack.c.l.b16 %v246
      %v403 = vunpack.c.l.b16 %v247
      %v404 = vunpack.c.l.b16 %v248
      %v405 = vunpack.c.l.b16 %v249
      %v406 = vunpack.c.l.b16 %v250
      %v407 = vunpack.c.l.b16 %v251
      %v408 = vunpack.c.l.b16 %v252
      %v409 = vunpack.c.l.b16 %v253
      %v410 = vunpack.c.l.b16 %v254
      %v411 = vunpack.c.l.b16 %v255
      %v412 = vunpack.c.l.b16 %v256
      %v413 = vunpack.c.l.b16 %v257
      %v414 = vunpack.c.l.b16 %v258
      %v415 = vunpack.c.l.b16 %v259
      %v416 = vunpack.c.l.b16 %v260
      %v417 = vunpack.c.l.b16 %v261
      %v418 = vunpack.c.l.b16 %v262
      %v419 = vunpack.c.l.b16 %v263
      %v420 = vunpack.c.l.b16 %v264
      %v421 = vunpack.c.l.b16 %v265
      %v422 = vunpack.c.l.b16 %v266
      %v423 = vunpack.c.l.b16 %v267
      %v424 = vunpack.c.l.b16 %v268
      %v425 = vunpack.c.l.b16 %v269
      %v426 = vunpack.c.l.b16 %v270
      %v427 = vunpack.c.l.b16 %v271
      %v428 = vunpack.c.l.b16 %v272
      %v429 = vunpack.c.l.b16 %v273
      %v430 = vunpack.c.l.b16 %v274
      %v431 = vunpack.c.l.b16 %v275
      %v432 = vunpack.c.l.b16 %v276
      %v433 = vunpack.c.l.b16 %v277
      %v434 = vunpack.c.l.b16 %v278
      %v435 = vunpack.c.l.b16 %v279
      %v436 = vunpack.c.l.b16 %v280
      %v437 = vunpack.c.l.b16 %v281
      %v438 = vunpack.c.l.b16 %v282
      %v439 = vunpack.c.l.b16 %v283
      %v440 = vunpack.c.l.b16 %v284
      %v441 = vunpack.c.l.b16 %v285
      %v442 = vunpack.c.l.b16 %v286
      %v443 = vunpack.c.l.b16 %v287
      %v444 = vunpack.c.l.b16 %v288
      %v445 = vpack.c.b16 %v382, %v381
      %v446 = vpack.c.b16 %v384, %v383
      %v447 = vpack.c.b16 %v386, %v385
      %v448 = vpack.c.b16 %v388, %v387
      %v449 = vpack.c.b16 %v390, %v389
      %v450 = vpack.c.b16 %v392, %v391
      %v451 = vpack.c.b16 %v394, %v393
      %v452 = vpack.c.b16 %v396, %v395
      %v453 = vpack.c.b16 %v398, %v397
      %v454 = vpack.c.b16 %v400, %v399
      %v455 = vpack.c.b16 %v402, %v401
      %v456 = vpack.c.b16 %v404, %v403
      %v457 = vpack.c.b16 %v406, %v405
      %v458 = vpack.c.b16 %v408, %v407
      %v459 = vpack.c.b16 %v410, %v409
      %v460 = vpack.c.b16 %v412, %v411
      %v461 = vpack.c.b16 %v414, %v413
      %v462 = vpack.c.b16 %v416, %v415
      %v463 = vpack.c.b16 %v418, %v417
      %v464 = vpack.c.b16 %v420, %v419
      %v465 = vpack.c.b16 %v422, %v421
      %v466 = vpack.c.b16 %v424, %v423
      %v467 = vpack.c.b16 %v426, %v425
      %v468 = vpack.c.b16 %v428, %v427
      %v469 = vpack.c.b16 %v430, %v429
      %v470 = vpack.c.b16 %v432, %v431
      %v471 = vpack.c.b16 %v434, %v433
      %v472 = vpack.c.b16 %v436, %v435
      %v473 = vpack.c.b16 %v438, %v437
      %v474 = vpack.c.b16 %v440, %v439
      %v475 = vpack.c.b16 %v442, %v441
      %v476 = vpack.c.b16 %v444, %v443
      %509 = vmatprep.subr.bf16.mxu0 0
      %510 = vmatpush1.bf16.msra.mxu0 %v445
      %511 = vmatprep.subr.bf16.mxu0 0
      %512 = vmatpush1.bf16.msra.mxu0 %v446
      %513 = vmatprep.subr.bf16.mxu0 0
      %514 = vmatpush1.bf16.msra.mxu0 %v447
      %515 = vmatprep.subr.bf16.mxu0 0
      %516 = vmatpush1.bf16.msra.mxu0 %v448
      %517 = vmatprep.subr.bf16.mxu0 0
      %518 = vmatpush1.bf16.msra.mxu0 %v449
      %519 = vmatprep.subr.bf16.mxu0 0
      %520 = vmatpush1.bf16.msra.mxu0 %v450
      %521 = vmatprep.subr.bf16.mxu0 0
      %522 = vmatpush1.bf16.msra.mxu0 %v451
      %523 = vmatprep.subr.bf16.mxu0 0
      %524 = vmatpush1.bf16.msra.mxu0 %v452
      %525 = vmatprep.subr.bf16.mxu0 0
      %526 = vmatpush1.bf16.msra.mxu0 %v453
      %527 = vmatprep.subr.bf16.mxu0 0
      %528 = vmatpush1.bf16.msra.mxu0 %v454
      %529 = vmatprep.subr.bf16.mxu0 0
      %530 = vmatpush1.bf16.msra.mxu0 %v455
      %531 = vmatprep.subr.bf16.mxu0 0
      %532 = vmatpush1.bf16.msra.mxu0 %v456
      %533 = vmatprep.subr.bf16.mxu0 0
      %534 = vmatpush1.bf16.msra.mxu0 %v457
      %535 = vmatprep.subr.bf16.mxu0 0
      %536 = vmatpush1.bf16.msra.mxu0 %v458
      %537 = vmatprep.subr.bf16.mxu0 0
      %538 = vmatpush1.bf16.msra.mxu0 %v459
      %539 = vmatprep.subr.bf16.mxu0 0
      %540 = vmatpush1.bf16.msra.mxu0 %v460
      %541 = vmatprep.mubr.bf16.mxu0 %v311
      %542 = vmatmul.mubr.bf16.gmra.mrb[0].mxu0 %v303
      %v543 = vpop.f32.mrb[0].mxu0
      %v544 = vadd.f32 %v293, %v543
      %v545 = vpop.f32.mrb[0].mxu0
      %v546 = vpop.f32.mrb[0].mxu0
      %v547 = vpop.f32.mrb[0].mxu0
      %548 = vdwg.mxu0
      %549 = vmatprep.subr.bf16.mxu0 0
      %550 = vmatpush1.bf16.msra.mxu0 %v461
      %551 = vmatprep.subr.bf16.mxu0 0
      %552 = vmatpush1.bf16.msra.mxu0 %v462
      %553 = vmatprep.subr.bf16.mxu0 0
      %554 = vmatpush1.bf16.msra.mxu0 %v463
      %555 = vmatprep.subr.bf16.mxu0 0
      %556 = vmatpush1.bf16.msra.mxu0 %v464
      %557 = vmatprep.subr.bf16.mxu0 0
      %558 = vmatpush1.bf16.msra.mxu0 %v465
      %559 = vmatprep.subr.bf16.mxu0 0
      %560 = vmatpush1.bf16.msra.mxu0 %v466
      %561 = vmatprep.subr.bf16.mxu0 0
      %562 = vmatpush1.bf16.msra.mxu0 %v467
      %563 = vmatprep.subr.bf16.mxu0 0
      %564 = vmatpush1.bf16.msra.mxu0 %v468
      %565 = vmatprep.subr.bf16.mxu0 0
      %566 = vmatpush1.bf16.msra.mxu0 %v469
      %567 = vmatprep.subr.bf16.mxu0 0
      %568 = vmatpush1.bf16.msra.mxu0 %v470
      %569 = vmatprep.subr.bf16.mxu0 0
      %570 = vmatpush1.bf16.msra.mxu0 %v471
      %571 = vmatprep.subr.bf16.mxu0 0
      %572 = vmatpush1.bf16.msra.mxu0 %v472
      %573 = vmatprep.subr.bf16.mxu0 0
      %574 = vmatpush1.bf16.msra.mxu0 %v473
      %575 = vmatprep.subr.bf16.mxu0 0
      %576 = vmatpush1.bf16.msra.mxu0 %v474
      %577 = vmatprep.subr.bf16.mxu0 0
      %578 = vmatpush1.bf16.msra.mxu0 %v475
      %579 = vmatprep.subr.bf16.mxu0 0
      %580 = vmatpush1.bf16.msra.mxu0 %v476
      %581 = vmatprep.mubr.bf16.mxu0 %v312
      %582 = vmatmul.mubr.bf16.gmra.mrb[0].mxu0 %v310
      %v583 = vpop.f32.mrb[0].mxu0
      %v584 = vadd.f32 %v544, %v583
      %v585 = vpop.f32.mrb[0].mxu0
      %v586 = vpop.f32.mrb[0].mxu0
      %v587 = vpop.f32.mrb[0].mxu0
      %588 = vdwg.mxu0
      %589 = vst [vmem:[%s222] sm:$0xf] %v584
      %p590 = scmp.lt.s32.totalorder %s18, 1
      %s591 = scalar_select %p590, %s18, 1
      %p592 = scmp.lt.s32.totalorder %s19, 0
      %s593 = scalar_select %p592, %s19, 0
      %s594 = sadd.s32 %s593, %s591
      %s595 = smul.addr %s594, 4
      %s596 = scalar_lea.vmem %s3, %s595
      // Predicated region
      $region33: #{upchannel_ban_forward.7} parent=31 // pred_check
        %p597 = pneg %p121
      $region34: #{upchannel_ban_forward.7} parent=31 // pred_check_branch
        %599 = sbr.rel (%p597) target = $region36
      $region35: #{upchannel_ban_forward.7} parent=31 // pred_region
        _
      $region36: #{upchannel_ban_forward.7} parent=31 // pred_fallthru
        _
    $region32: #{upchannel_ban_forward.7} parent=5 // pred_fallthru
      _
    %p600 = scmp.le.s32.totalorder 2, %s9
    // Predicated region
    $region37: #{upchannel_ban_forward.7} parent=5 // pred_check
      %p601 = pneg %p600
    $region38: #{upchannel_ban_forward.7} parent=5 // pred_check_branch
      %603 = sbr.rel (%p601) target = $region40
    $region39: #{upchannel_ban_forward.7} parent=5 // pred_region
      %s604 = ssub.s32 %s9, 2
      // Predicated region
      $region41: #{upchannel_ban_forward.7} parent=39 // pred_check
        %p605 = pneg %p127
      $region42: #{upchannel_ban_forward.7} parent=39 // pred_check_branch
        %607 = sbr.rel (%p605) target = $region44
      $region43: #{upchannel_ban_forward.7} parent=39 // pred_region
        %p608 = scmp.lt.s32.totalorder %s20, 1
        %s609 = scalar_select %p608, %s20, 1
        %p610 = scmp.lt.s32.totalorder %s21, 0
        %s611 = scalar_select %p610, %s21, 0
        %s612 = sadd.s32 %s611, %s609
        %s613 = smul.addr %s612, 4
        %s614 = scalar_lea.vmem %s3, %s613
      $region44: #{upchannel_ban_forward.7} parent=39 // pred_fallthru
        _
    $region40: #{upchannel_ban_forward.7} parent=5 // pred_fallthru
      _
  $region6: #{upchannel_ban_forward.7} parent=0 // loop_footer
    %s13 = sadd.s32 1, %s9
  $region7: #{upchannel_ban_forward.7} parent=0 // loop_footer_branch
    %8 = sbr.rel target = $region3
  $region8: #{upchannel_ban_forward.7} parent=0 // loop_exit
    _

// kernel: upchannel_ban_forward.6
$region0: #{upchannel_ban_forward.6}
  #allocation0 [shape = 'u32[]', space=smem, size = 0x4, offset = 0x4, fixed_abs, tag = 'smem constant byte address 0x4 - core index']
  #allocation1 [shape = 'u32[144,128]{1,0:T(1,128)}', space=vmem, size = 0x12000, scoped, tag = 'internal scratch']
  %s0 = inlined_call_operand.vmem [shape: bf16[2,1024,128], index: 0, kind: input, shape index: {}]
  %s1 = inlined_call_operand.vmem [shape: bf16[2,2,512], index: 1, kind: input, shape index: {}]
  %s2 = inlined_call_operand.vmem [shape: f32[2,1], index: 2, kind: input, shape index: {}]
  %s3 = inlined_call_operand.vmem [shape: f32[2,2,128], index: 3, kind: output, shape index: {}]
  %s4 = sld [smem:[#allocation0]]
  $region45: #{upchannel_ban_forward.6} parent=0
    _
  %s6 = ssub.s32 1, %s4
  %s7 = scalar_select 0, %s6, %s4
  loop: start=0, step=1, limit=4
  $region2: #{upchannel_ban_forward.6} parent=0 // loop_pre_header
    _
  $region3: #{upchannel_ban_forward.6} parent=0 // loop_header
    %s9 = sphi 0, %s13
    %p10 = scmp.ge.s32.totalorder %s9, 4
    %s16 = sphi 0, %s28
    %s17 = sphi 0, %s24
    %s18 = sphi 0, %s16
    %s19 = sphi 0, %s17
    %s20 = sphi 0, %s18
    %s21 = sphi 0, %s19
    %s33 = sphi 0, %s35
    %s36 = sphi 0, %s33
    %s37 = sphi 0, %s36
    %s53 = sphi 0, %s37
    %s59 = sphi 0, %s61
    %s62 = sphi 0, %s59
    %s63 = sphi 0, %s62
    %s79 = sphi 0, %s63
    %s83 = sphi 0, %s83
    %s85 = sphi 0, %s83
    %s86 = sphi 0, %s85
    %s100 = sphi 0, %s86
    %s108 = sphi 0, %s110
    %s111 = sphi 0, %s108
    %s112 = sphi 0, %s111
    %s128 = sphi 0, %s112
  $region4: #{upchannel_ban_forward.6} parent=0 // loop_header_branch
    %12 = sbr.rel (%p10) target = $region8
  $region5: #{upchannel_ban_forward.6} parent=0 // loop_body
    %s14 = ssub.s32 %s9, 1
    %s15 = ssub.s32 %s9, 2
    %s22 = sadd.s32 1, %s17
    %p23 = scmp.ge.s32.totalorder %s22, 1
    %s24 = scalar_select %p23, 0, %s22
    %s25 = sadd.s32 1, %s16
    %s26 = scalar_select %p23, %s25, %s16
    %p27 = scmp.ge.s32.totalorder %s26, 2
    %s28 = scalar_select %p27, 0, %s26
    %s29 = ssub.s32 %s16, %s28
    %s30 = ssub.s32 %s17, %s24
    %s31 = sor.u32 %s29, %s30
    %p32 = scmp.eq.s32.totalorder %s31, 0
    %s34 = sadd.s32 %s33, 1
    %s35 = scalar_select %p32, %s33, %s34
    %p38 = pneg %p32
    %p39 = scmp.eq.s32.totalorder %s9, 1
    %p40 = por %p38, %p39
    %p41 = scmp.ne.s32.totalorder %s33, %s36
    %p42 = scmp.eq.s32.totalorder %s9, 0
    %p43 = por %p41, %p42
    %p44 = scmp.ne.s32.totalorder %s33, %s36
    %p45 = scmp.eq.s32.totalorder %s14, 1
    %p46 = por %p44, %p45
    %p47 = scmp.ne.s32.totalorder %s36, %s37
    %p48 = scmp.eq.s32.totalorder %s14, 0
    %p49 = por %p47, %p48
    %p50 = scmp.ne.s32.totalorder %s36, %s37
    %p51 = scmp.eq.s32.totalorder %s15, 1
    %p52 = por %p50, %p51
    %p54 = scmp.ne.s32.totalorder %s37, %s53
    %p55 = scmp.eq.s32.totalorder %s15, 0
    %p56 = por %p54, %p55
    %s57 = ssub.s32 %s16, %s28
    %p58 = scmp.eq.s32.totalorder %s57, 0
    %s60 = sadd.s32 %s59, 1
    %s61 = scalar_select %p58, %s59, %s60
    %p64 = pneg %p58
    %p65 = scmp.eq.s32.totalorder %s9, 1
    %p66 = por %p64, %p65
    %p67 = scmp.ne.s32.totalorder %s59, %s62
    %p68 = scmp.eq.s32.totalorder %s9, 0
    %p69 = por %p67, %p68
    %p70 = scmp.ne.s32.totalorder %s59, %s62
    %p71 = scmp.eq.s32.totalorder %s14, 1
    %p72 = por %p70, %p71
    %p73 = scmp.ne.s32.totalorder %s62, %s63
    %p74 = scmp.eq.s32.totalorder %s14, 0
    %p75 = por %p73, %p74
    %p76 = scmp.ne.s32.totalorder %s62, %s63
    %p77 = scmp.eq.s32.totalorder %s15, 1
    %p78 = por %p76, %p77
    %p80 = scmp.ne.s32.totalorder %s63, %s79
    %p81 = scmp.eq.s32.totalorder %s15, 0
    %p82 = por %p80, %p81
    %s84 = sadd.s32 %s83, 1
    %p87 = scmp.eq.s32.totalorder %s9, 1
    %p88 = scmp.ne.s32.totalorder %s83, %s85
    %p89 = scmp.eq.s32.totalorder %s9, 0
    %p90 = por %p88, %p89
    %p91 = scmp.ne.s32.totalorder %s83, %s85
    %p92 = scmp.eq.s32.totalorder %s14, 1
    %p93 = por %p91, %p92
    %p94 = scmp.ne.s32.totalorder %s85, %s86
    %p95 = scmp.eq.s32.totalorder %s14, 0
    %p96 = por %p94, %p95
    %p97 = scmp.ne.s32.totalorder %s85, %s86
    %p98 = scmp.eq.s32.totalorder %s15, 1
    %p99 = por %p97, %p98
    %p101 = scmp.ne.s32.totalorder %s86, %s100
    %p102 = scmp.eq.s32.totalorder %s15, 0
    %p103 = por %p101, %p102
    %s104 = ssub.s32 %s16, %s28
    %s105 = ssub.s32 %s17, %s24
    %s106 = sor.u32 %s104, %s105
    %p107 = scmp.eq.s32.totalorder %s106, 0
    %s109 = sadd.s32 %s108, 1
    %s110 = scalar_select %p107, %s108, %s109
    %p113 = pneg %p107
    %p114 = scmp.eq.s32.totalorder %s9, 1
    %p115 = por %p113, %p114
    %p116 = scmp.ne.s32.totalorder %s108, %s111
    %p117 = scmp.eq.s32.totalorder %s9, 0
    %p118 = por %p116, %p117
    %p119 = scmp.ne.s32.totalorder %s108, %s111
    %p120 = scmp.eq.s32.totalorder %s14, 1
    %p121 = por %p119, %p120
    %p122 = scmp.ne.s32.totalorder %s111, %s112
    %p123 = scmp.eq.s32.totalorder %s14, 0
    %p124 = por %p122, %p123
    %p125 = scmp.ne.s32.totalorder %s111, %s112
    %p126 = scmp.eq.s32.totalorder %s15, 1
    %p127 = por %p125, %p126
    %p129 = scmp.ne.s32.totalorder %s112, %s128
    %p130 = scmp.eq.s32.totalorder %s15, 0
    %p131 = por %p129, %p130
    %p132 = scmp.le.s32.totalorder 1, %s9
    %p133 = scmp.lt.s32.totalorder %s9, 3
    %p134 = pnand %p132, %p133
    %p135 = pneg %p134
    // Predicated region
    $region9: #{upchannel_ban_forward.6} parent=5 // pred_check
      _
    $region10: #{upchannel_ban_forward.6} parent=5 // pred_check_branch
      %137 = sbr.rel (%p134) target = $region12
    $region11: #{upchannel_ban_forward.6} parent=5 // pred_region
      %s138 = ssub.s32 %s9, 1
      // Predicated region
      $region13: #{upchannel_ban_forward.6} parent=11 // pred_check
        %p139 = pneg %p96
      $region14: #{upchannel_ban_forward.6} parent=11 // pred_check_branch
        %141 = sbr.rel (%p139) target = $region16
      $region15: #{upchannel_ban_forward.6} parent=11 // pred_region
        _
      $region16: #{upchannel_ban_forward.6} parent=11 // pred_fallthru
        _
    $region12: #{upchannel_ban_forward.6} parent=5 // pred_fallthru
      _
    %p142 = scmp.lt.s32.totalorder %s9, 2
    // Predicated region
    $region17: #{upchannel_ban_forward.6} parent=5 // pred_check
      %p143 = pneg %p142
    $region18: #{upchannel_ban_forward.6} parent=5 // pred_check_branch
      %145 = sbr.rel (%p143) target = $region20
    $region19: #{upchannel_ban_forward.6} parent=5 // pred_region
      // Predicated region
      $region21: #{upchannel_ban_forward.6} parent=19 // pred_check
        %p146 = pneg %p43
      $region22: #{upchannel_ban_forward.6} parent=19 // pred_check_branch
        %148 = sbr.rel (%p146) target = $region24
      $region23: #{upchannel_ban_forward.6} parent=19 // pred_region
        %p149 = scmp.lt.s32.totalorder %s16, 1
        %s150 = scalar_select %p149, %s16, 1
        %p151 = scmp.lt.s32.totalorder %s17, 0
        %s152 = scalar_select %p151, %s17, 0
        %s153 = smul.addr %s150, 128
        %s154 = sadd.s32 %s152, %s153
        %s155 = smul.addr %s154, 4
        %s156 = scalar_lea.vmem %s0, %s155
      $region24: #{upchannel_ban_forward.6} parent=19 // pred_fallthru
        _
      // Predicated region
      $region25: #{upchannel_ban_forward.6} parent=19 // pred_check
        %p157 = pneg %p69
      $region26: #{upchannel_ban_forward.6} parent=19 // pred_check_branch
        %159 = sbr.rel (%p157) target = $region28
      $region27: #{upchannel_ban_forward.6} parent=19 // pred_region
        %p160 = scmp.lt.s32.totalorder %s16, 1
        %s161 = scalar_select %p160, %s16, 1
        %s162 = smul.addr %s161, 4
        %s163 = scalar_lea.vmem %s1, %s162
      $region28: #{upchannel_ban_forward.6} parent=19 // pred_fallthru
        _
    $region20: #{upchannel_ban_forward.6} parent=5 // pred_fallthru
      _
    %p164 = scmp.le.s32.totalorder 1, %s9
    %p165 = scmp.lt.s32.totalorder %s9, 3
    %p166 = pnand %p164, %p165
    %p167 = pneg %p166
    // Predicated region
    $region29: #{upchannel_ban_forward.6} parent=5 // pred_check
      _
    $region30: #{upchannel_ban_forward.6} parent=5 // pred_check_branch
      %169 = sbr.rel (%p166) target = $region32
    $region31: #{upchannel_ban_forward.6} parent=5 // pred_region
      %s170 = ssub.s32 %s9, 1
      %p171 = scmp.lt.s32.totalorder %s18, 1
      %s172 = scalar_select %p171, %s18, 1
      %p173 = scmp.lt.s32.totalorder %s19, 0
      %s174 = scalar_select %p173, %s19, 0
      %s175 = smul.addr %s172, 128
      %s176 = sadd.s32 %s174, %s175
      %s177 = smul.addr %s176, 4
      %s178 = scalar_lea.vmem %s0, %s177
      %p179 = pneg %p49
      %p180 = pneg %p46
      %p181 = scmp.lt.s32.totalorder %s18, 1
      %s182 = scalar_select %p181, %s18, 1
      %s183 = smul.addr %s182, 4
      %s184 = scalar_lea.vmem %s1, %s183
      %p185 = pneg %p75
      %p186 = pneg %p72
      %p187 = pneg %p96
      %p188 = pneg %p93
      %p189 = pneg %p124
      %p190 = pneg %p121
      %p191 = scmp.lt.s32.totalorder %s18, 1
      %s192 = scalar_select %p191, %s18, 1
      %p193 = scmp.lt.s32.totalorder %s19, 0
      %s194 = scalar_select %p193, %s19, 0
      %s195 = sadd.s32 %s194, %s192
      %s196 = smul.addr %s195, 2
      %s197 = scalar_lea.vmem %s3, %s196
      %p198 = scmp.lt.s32.totalorder %s18, 1
      %s199 = scalar_select %p198, %s18, 1
      %p200 = scmp.lt.s32.totalorder %s19, 0
      %s201 = scalar_select %p200, %s19, 0
      %s202 = smul.addr %s199, 128
      %s203 = sadd.s32 %s201, %s202
      %s204 = smul.addr %s203, 4
      %s205 = scalar_lea.vmem %s0, %s204
      %p206 = scmp.lt.s32.totalorder %s18, 1
      %s207 = scalar_select %p206, %s18, 1
      %s208 = smul.addr %s207, 4
      %s209 = scalar_lea.vmem %s1, %s208
      %p210 = scmp.lt.s32.totalorder %s18, 1
      %s211 = scalar_select %p210, %s18, 1
      %p212 = scmp.lt.s32.totalorder %s19, 0
      %s213 = scalar_select %p212, %s19, 0
      %s214 = sadd.s32 %s213, %s211
      %s215 = smul.addr %s214, 2
      %s216 = scalar_lea.vmem %s3, %s215
      %v218 = vld [vmem:[%s209] sm:$0xf]
      %v219 = vld [vmem:[%s205] sm:$0xf]
      %v220 = vld [vmem:[%s205 + $0x4] sm:$0xf]
      %v221 = vld [vmem:[%s205 + $0x8] sm:$0xf]
      %v222 = vld [vmem:[%s205 + $0xc] sm:$0xf]
      %v223 = vld [vmem:[%s205 + $0x10] sm:$0xf]
      %v224 = vld [vmem:[%s205 + $0x14] sm:$0xf]
      %v225 = vld [vmem:[%s205 + $0x18] sm:$0xf]
      %v226 = vld [vmem:[%s205 + $0x1c] sm:$0xf]
      %v227 = vld [vmem:[%s205 + $0x20] sm:$0xf]
      %v228 = vld [vmem:[%s205 + $0x24] sm:$0xf]
      %v229 = vld [vmem:[%s205 + $0x28] sm:$0xf]
      %v230 = vld [vmem:[%s205 + $0x2c] sm:$0xf]
      %v231 = vld [vmem:[%s205 + $0x30] sm:$0xf]
      %v232 = vld [vmem:[%s205 + $0x34] sm:$0xf]
      %v233 = vld [vmem:[%s205 + $0x38] sm:$0xf]
      %v234 = vld [vmem:[%s205 + $0x3c] sm:$0xf]
      %v235 = vld [vmem:[%s205 + $0x40] sm:$0xf]
      %v236 = vld [vmem:[%s205 + $0x44] sm:$0xf]
      %v237 = vld [vmem:[%s205 + $0x48] sm:$0xf]
      %v238 = vld [vmem:[%s205 + $0x4c] sm:$0xf]
      %v239 = vld [vmem:[%s205 + $0x50] sm:$0xf]
      %v240 = vld [vmem:[%s205 + $0x54] sm:$0xf]
      %v241 = vld [vmem:[%s205 + $0x58] sm:$0xf]
      %v242 = vld [vmem:[%s205 + $0x5c] sm:$0xf]
      %v243 = vld [vmem:[%s205 + $0x60] sm:$0xf]
      %v244 = vld [vmem:[%s205 + $0x64] sm:$0xf]
      %v245 = vld [vmem:[%s205 + $0x68] sm:$0xf]
      %v246 = vld [vmem:[%s205 + $0x6c] sm:$0xf]
      %v247 = vld [vmem:[%s205 + $0x70] sm:$0xf]
      %v248 = vld [vmem:[%s205 + $0x74] sm:$0xf]
      %v249 = vld [vmem:[%s205 + $0x78] sm:$0xf]
      %v250 = vld [vmem:[%s205 + $0x7c] sm:$0xf]
      %v251 = vld [vmem:[%s205 + $0x80] sm:$0xf]
      %v252 = vld [vmem:[%s205 + $0x84] sm:$0xf]
      %v253 = vld [vmem:[%s205 + $0x88] sm:$0xf]
      %v254 = vld [vmem:[%s205 + $0x8c] sm:$0xf]
      %v255 = vld [vmem:[%s205 + $0x90] sm:$0xf]
      %v256 = vld [vmem:[%s205 + $0x94] sm:$0xf]
      %v257 = vld [vmem:[%s205 + $0x98] sm:$0xf]
      %v258 = vld [vmem:[%s205 + $0x9c] sm:$0xf]
      %v259 = vld [vmem:[%s205 + $0xa0] sm:$0xf]
      %v260 = vld [vmem:[%s205 + $0xa4] sm:$0xf]
      %v261 = vld [vmem:[%s205 + $0xa8] sm:$0xf]
      %v262 = vld [vmem:[%s205 + $0xac] sm:$0xf]
      %v263 = vld [vmem:[%s205 + $0xb0] sm:$0xf]
      %v264 = vld [vmem:[%s205 + $0xb4] sm:$0xf]
      %v265 = vld [vmem:[%s205 + $0xb8] sm:$0xf]
      %v266 = vld [vmem:[%s205 + $0xbc] sm:$0xf]
      %v267 = vld [vmem:[%s205 + $0xc0] sm:$0xf]
      %v268 = vld [vmem:[%s205 + $0xc4] sm:$0xf]
      %v269 = vld [vmem:[%s205 + $0xc8] sm:$0xf]
      %v270 = vld [vmem:[%s205 + $0xcc] sm:$0xf]
      %v271 = vld [vmem:[%s205 + $0xd0] sm:$0xf]
      %v272 = vld [vmem:[%s205 + $0xd4] sm:$0xf]
      %v273 = vld [vmem:[%s205 + $0xd8] sm:$0xf]
      %v274 = vld [vmem:[%s205 + $0xdc] sm:$0xf]
      %v275 = vld [vmem:[%s205 + $0xe0] sm:$0xf]
      %v276 = vld [vmem:[%s205 + $0xe4] sm:$0xf]
      %v277 = vld [vmem:[%s205 + $0xe8] sm:$0xf]
      %v278 = vld [vmem:[%s205 + $0xec] sm:$0xf]
      %v279 = vld [vmem:[%s205 + $0xf0] sm:$0xf]
      %v280 = vld [vmem:[%s205 + $0xf4] sm:$0xf]
      %v281 = vld [vmem:[%s205 + $0xf8] sm:$0xf]
      %v282 = vld [vmem:[%s205 + $0xfc] sm:$0xf]
      %v283 = vld [vmem:[%s2] sm:$0x3]
      %285 = vset.pattern.permute.xlu0 0
      %286 = vperm.xlu0 %285, %v283
      %v287 = vpop.permute.xlu0 %286
      %v291 = vunpack.c.l.s4 1966171168
      %v292 = vunpack.c.0.s8 %v291
      %v293 = vlaneseq
      %v294 = vshrl.u32 %v293, 7
      %v295 = vsub.s32 %v292, %v294
      %v296 = vrot.slane %v218, %v295
      %v297 = vcombine.high %v296, %v296
      %v299 = vunpack.c.l.s4 1966171168
      %v300 = vunpack.c.0.s8 %v299
      %v301 = vlaneseq
      %v302 = vshrl.u32 %v301, 7
      %v303 = vsub.s32 %v300, %v302
      %v304 = vrot.slane %v296, %v303
      %v306 = vunpack.c.l.s4 1966171168
      %v307 = vunpack.c.0.s8 %v306
      %v308 = vlaneseq
      %v309 = vshrl.u32 %v308, 7
      %v310 = vsub.s32 %v307, %v309
      %v311 = vrot.slane %v297, %v310
      %v312 = vcombine.high %v304, %v304
      %v313 = vcombine.high %v311, %v311
      %v382 = vunpack.c.l.b16 %v219
      %v383 = vunpack.c.l.b16 %v220
      %v384 = vunpack.c.l.b16 %v221
      %v385 = vunpack.c.l.b16 %v222
      %v386 = vunpack.c.l.b16 %v223
      %v387 = vunpack.c.l.b16 %v224
      %v388 = vunpack.c.l.b16 %v225
      %v389 = vunpack.c.l.b16 %v226
      %v390 = vunpack.c.l.b16 %v227
      %v391 = vunpack.c.l.b16 %v228
      %v392 = vunpack.c.l.b16 %v229
      %v393 = vunpack.c.l.b16 %v230
      %v394 = vunpack.c.l.b16 %v231
      %v395 = vunpack.c.l.b16 %v232
      %v396 = vunpack.c.l.b16 %v233
      %v397 = vunpack.c.l.b16 %v234
      %v398 = vunpack.c.l.b16 %v235
      %v399 = vunpack.c.l.b16 %v236
      %v400 = vunpack.c.l.b16 %v237
      %v401 = vunpack.c.l.b16 %v238
      %v402 = vunpack.c.l.b16 %v239
      %v403 = vunpack.c.l.b16 %v240
      %v404 = vunpack.c.l.b16 %v241
      %v405 = vunpack.c.l.b16 %v242
      %v406 = vunpack.c.l.b16 %v243
      %v407 = vunpack.c.l.b16 %v244
      %v408 = vunpack.c.l.b16 %v245
      %v409 = vunpack.c.l.b16 %v246
      %v410 = vunpack.c.l.b16 %v247
      %v411 = vunpack.c.l.b16 %v248
      %v412 = vunpack.c.l.b16 %v249
      %v413 = vunpack.c.l.b16 %v250
      %v414 = vunpack.c.l.b16 %v251
      %v415 = vunpack.c.l.b16 %v252
      %v416 = vunpack.c.l.b16 %v253
      %v417 = vunpack.c.l.b16 %v254
      %v418 = vunpack.c.l.b16 %v255
      %v419 = vunpack.c.l.b16 %v256
      %v420 = vunpack.c.l.b16 %v257
      %v421 = vunpack.c.l.b16 %v258
      %v422 = vunpack.c.l.b16 %v259
      %v423 = vunpack.c.l.b16 %v260
      %v424 = vunpack.c.l.b16 %v261
      %v425 = vunpack.c.l.b16 %v262
      %v426 = vunpack.c.l.b16 %v263
      %v427 = vunpack.c.l.b16 %v264
      %v428 = vunpack.c.l.b16 %v265
      %v429 = vunpack.c.l.b16 %v266
      %v430 = vunpack.c.l.b16 %v267
      %v431 = vunpack.c.l.b16 %v268
      %v432 = vunpack.c.l.b16 %v269
      %v433 = vunpack.c.l.b16 %v270
      %v434 = vunpack.c.l.b16 %v271
      %v435 = vunpack.c.l.b16 %v272
      %v436 = vunpack.c.l.b16 %v273
      %v437 = vunpack.c.l.b16 %v274
      %v438 = vunpack.c.l.b16 %v275
      %v439 = vunpack.c.l.b16 %v276
      %v440 = vunpack.c.l.b16 %v277
      %v441 = vunpack.c.l.b16 %v278
      %v442 = vunpack.c.l.b16 %v279
      %v443 = vunpack.c.l.b16 %v280
      %v444 = vunpack.c.l.b16 %v281
      %v445 = vunpack.c.l.b16 %v282
      %v446 = vpack.c.b16 %v383, %v382
      %v447 = vpack.c.b16 %v385, %v384
      %v448 = vpack.c.b16 %v387, %v386
      %v449 = vpack.c.b16 %v389, %v388
      %v450 = vpack.c.b16 %v391, %v390
      %v451 = vpack.c.b16 %v393, %v392
      %v452 = vpack.c.b16 %v395, %v394
      %v453 = vpack.c.b16 %v397, %v396
      %v454 = vpack.c.b16 %v399, %v398
      %v455 = vpack.c.b16 %v401, %v400
      %v456 = vpack.c.b16 %v403, %v402
      %v457 = vpack.c.b16 %v405, %v404
      %v458 = vpack.c.b16 %v407, %v406
      %v459 = vpack.c.b16 %v409, %v408
      %v460 = vpack.c.b16 %v411, %v410
      %v461 = vpack.c.b16 %v413, %v412
      %v462 = vpack.c.b16 %v415, %v414
      %v463 = vpack.c.b16 %v417, %v416
      %v464 = vpack.c.b16 %v419, %v418
      %v465 = vpack.c.b16 %v421, %v420
      %v466 = vpack.c.b16 %v423, %v422
      %v467 = vpack.c.b16 %v425, %v424
      %v468 = vpack.c.b16 %v427, %v426
      %v469 = vpack.c.b16 %v429, %v428
      %v470 = vpack.c.b16 %v431, %v430
      %v471 = vpack.c.b16 %v433, %v432
      %v472 = vpack.c.b16 %v435, %v434
      %v473 = vpack.c.b16 %v437, %v436
      %v474 = vpack.c.b16 %v439, %v438
      %v475 = vpack.c.b16 %v441, %v440
      %v476 = vpack.c.b16 %v443, %v442
      %v477 = vpack.c.b16 %v445, %v444
      %510 = vmatprep.subr.bf16.mxu0 0
      %511 = vmatpush1.bf16.msra.mxu0 %v446
      %512 = vmatprep.subr.bf16.mxu0 0
      %513 = vmatpush1.bf16.msra.mxu0 %v447
      %514 = vmatprep.subr.bf16.mxu0 0
      %515 = vmatpush1.bf16.msra.mxu0 %v448
      %516 = vmatprep.subr.bf16.mxu0 0
      %517 = vmatpush1.bf16.msra.mxu0 %v449
      %518 = vmatprep.subr.bf16.mxu0 0
      %519 = vmatpush1.bf16.msra.mxu0 %v450
      %520 = vmatprep.subr.bf16.mxu0 0
      %521 = vmatpush1.bf16.msra.mxu0 %v451
      %522 = vmatprep.subr.bf16.mxu0 0
      %523 = vmatpush1.bf16.msra.mxu0 %v452
      %524 = vmatprep.subr.bf16.mxu0 0
      %525 = vmatpush1.bf16.msra.mxu0 %v453
      %526 = vmatprep.subr.bf16.mxu0 0
      %527 = vmatpush1.bf16.msra.mxu0 %v454
      %528 = vmatprep.subr.bf16.mxu0 0
      %529 = vmatpush1.bf16.msra.mxu0 %v455
      %530 = vmatprep.subr.bf16.mxu0 0
      %531 = vmatpush1.bf16.msra.mxu0 %v456
      %532 = vmatprep.subr.bf16.mxu0 0
      %533 = vmatpush1.bf16.msra.mxu0 %v457
      %534 = vmatprep.subr.bf16.mxu0 0
      %535 = vmatpush1.bf16.msra.mxu0 %v458
      %536 = vmatprep.subr.bf16.mxu0 0
      %537 = vmatpush1.bf16.msra.mxu0 %v459
      %538 = vmatprep.subr.bf16.mxu0 0
      %539 = vmatpush1.bf16.msra.mxu0 %v460
      %540 = vmatprep.subr.bf16.mxu0 0
      %541 = vmatpush1.bf16.msra.mxu0 %v461
      %542 = vmatprep.mubr.bf16.mxu0 %v311
      %543 = vmatmul.mubr.bf16.gmra.mrb[0].mxu0 %v304
      %v544 = vpop.f32.mrb[0].mxu0
      %v545 = vadd.f32 %v287, %v544
      %v546 = vpop.f32.mrb[0].mxu0
      %v547 = vpop.f32.mrb[0].mxu0
      %v548 = vpop.f32.mrb[0].mxu0
      %549 = vdwg.mxu0
      %550 = vmatprep.subr.bf16.mxu0 0
      %551 = vmatpush1.bf16.msra.mxu0 %v462
      %552 = vmatprep.subr.bf16.mxu0 0
      %553 = vmatpush1.bf16.msra.mxu0 %v463
      %554 = vmatprep.subr.bf16.mxu0 0
      %555 = vmatpush1.bf16.msra.mxu0 %v464
      %556 = vmatprep.subr.bf16.mxu0 0
      %557 = vmatpush1.bf16.msra.mxu0 %v465
      %558 = vmatprep.subr.bf16.mxu0 0
      %559 = vmatpush1.bf16.msra.mxu0 %v466
      %560 = vmatprep.subr.bf16.mxu0 0
      %561 = vmatpush1.bf16.msra.mxu0 %v467
      %562 = vmatprep.subr.bf16.mxu0 0
      %563 = vmatpush1.bf16.msra.mxu0 %v468
      %564 = vmatprep.subr.bf16.mxu0 0
      %565 = vmatpush1.bf16.msra.mxu0 %v469
      %566 = vmatprep.subr.bf16.mxu0 0
      %567 = vmatpush1.bf16.msra.mxu0 %v470
      %568 = vmatprep.subr.bf16.mxu0 0
      %569 = vmatpush1.bf16.msra.mxu0 %v471
      %570 = vmatprep.subr.bf16.mxu0 0
      %571 = vmatpush1.bf16.msra.mxu0 %v472
      %572 = vmatprep.subr.bf16.mxu0 0
      %573 = vmatpush1.bf16.msra.mxu0 %v473
      %574 = vmatprep.subr.bf16.mxu0 0
      %575 = vmatpush1.bf16.msra.mxu0 %v474
      %576 = vmatprep.subr.bf16.mxu0 0
      %577 = vmatpush1.bf16.msra.mxu0 %v475
      %578 = vmatprep.subr.bf16.mxu0 0
      %579 = vmatpush1.bf16.msra.mxu0 %v476
      %580 = vmatprep.subr.bf16.mxu0 0
      %581 = vmatpush1.bf16.msra.mxu0 %v477
      %582 = vmatprep.mubr.bf16.mxu0 %v313
      %583 = vmatmul.mubr.bf16.gmra.mrb[0].mxu0 %v312
      %v584 = vpop.f32.mrb[0].mxu0
      %v585 = vadd.f32 %v545, %v584
      %v586 = vpop.f32.mrb[0].mxu0
      %v587 = vpop.f32.mrb[0].mxu0
      %v588 = vpop.f32.mrb[0].mxu0
      %589 = vdwg.mxu0
      %590 = vst [vmem:[%s216] sm:$0x3] %v585
      %p591 = scmp.lt.s32.totalorder %s18, 1
      %s592 = scalar_select %p591, %s18, 1
      %p593 = scmp.lt.s32.totalorder %s19, 0
      %s594 = scalar_select %p593, %s19, 0
      %s595 = sadd.s32 %s594, %s592
      %s596 = smul.addr %s595, 2
      %s597 = scalar_lea.vmem %s3, %s596
      // Predicated region
      $region33: #{upchannel_ban_forward.6} parent=31 // pred_check
        %p598 = pneg %p121
      $region34: #{upchannel_ban_forward.6} parent=31 // pred_check_branch
        %600 = sbr.rel (%p598) target = $region36
      $region35: #{upchannel_ban_forward.6} parent=31 // pred_region
        _
      $region36: #{upchannel_ban_forward.6} parent=31 // pred_fallthru
        _
    $region32: #{upchannel_ban_forward.6} parent=5 // pred_fallthru
      _
    %p601 = scmp.le.s32.totalorder 2, %s9
    // Predicated region
    $region37: #{upchannel_ban_forward.6} parent=5 // pred_check
      %p602 = pneg %p601
    $region38: #{upchannel_ban_forward.6} parent=5 // pred_check_branch
      %604 = sbr.rel (%p602) target = $region40
    $region39: #{upchannel_ban_forward.6} parent=5 // pred_region
      %s605 = ssub.s32 %s9, 2
      // Predicated region
      $region41: #{upchannel_ban_forward.6} parent=39 // pred_check
        %p606 = pneg %p127
      $region42: #{upchannel_ban_forward.6} parent=39 // pred_check_branch
        %608 = sbr.rel (%p606) target = $region44
      $region43: #{upchannel_ban_forward.6} parent=39 // pred_region
        %p609 = scmp.lt.s32.totalorder %s20, 1
        %s610 = scalar_select %p609, %s20, 1
        %p611 = scmp.lt.s32.totalorder %s21, 0
        %s612 = scalar_select %p611, %s21, 0
        %s613 = sadd.s32 %s612, %s610
        %s614 = smul.addr %s613, 2
        %s615 = scalar_lea.vmem %s3, %s614
      $region44: #{upchannel_ban_forward.6} parent=39 // pred_fallthru
        _
    $region40: #{upchannel_ban_forward.6} parent=5 // pred_fallthru
      _
  $region6: #{upchannel_ban_forward.6} parent=0 // loop_footer
    %s13 = sadd.s32 1, %s9
  $region7: #{upchannel_ban_forward.6} parent=0 // loop_footer_branch
    %8 = sbr.rel target = $region3
  $region8: #{upchannel_ban_forward.6} parent=0 // loop_exit
    _

</llo_original>
